<compile_context>
chip_gen: v7x
topology: tpu7x:2x2x1
jax: 0.10.0
libtpu: 0.0.40
codegen_flags: <defaults>
</compile_context>

<pallas_src>
import jax
import jax.numpy as jnp
from jax import lax
from jax.experimental import pallas as pl
from jax.experimental.pallas import tpu as pltpu


# ----------------------------------------------------------------------------
# Kernel 1: ResNet-101 Bottleneck block (stride 1, downsample=None).
# ----------------------------------------------------------------------------
def bottleneck_kernel(x_ref, p1_ref, s1_ref, b1_ref, wb2_ref, s2_ref, b2_ref,
                      p3_ref, s3_ref, b3_ref, o_ref):
    # x_ref  : (1, H, W*Cin)       one image, lane-dense (W*Cin lanes)
    # p1_ref : (W*Cin, W*Cmid)     1x1 conv as block-diagonal band matrix
    # wb2_ref: (3*W*Cmid, W*Cmid)  3x3 SAME conv as block-banded matrix
    # p3_ref : (W*Cmid, W*Cin)     1x1 conv as block-diagonal band matrix
    # s*/b*  : (1, W*C)            folded inference-BN scale / bias
    # o_ref  : (1, H, W*Cin)
    H = o_ref.shape[1]
    WCmid = wb2_ref.shape[1]

    x = x_ref[0]                                               # (H, W*Cin)

    # conv1 (1x1) -> bn1 -> relu : one lane-dense MXU matmul
    h1 = jnp.dot(x, p1_ref[...], preferred_element_type=jnp.float32)
    out1 = jnp.maximum(h1 * s1_ref[...] + b1_ref[...], 0.0)   # (H, W*Cmid)

    # conv2 (3x3, SAME) -> bn2 -> relu : one band matmul
    zrow = jnp.zeros((1, WCmid), jnp.float32)
    m = jnp.concatenate([zrow, out1, zrow], axis=0)            # (H+2, W*Cmid)
    m3 = jnp.concatenate([m[0:H], m[1:H + 1], m[2:H + 2]], axis=1)
    h2 = jnp.dot(m3, wb2_ref[...], preferred_element_type=jnp.float32)
    out2 = jnp.maximum(h2 * s2_ref[...] + b2_ref[...], 0.0)   # (H, W*Cmid)

    # conv3 (1x1) -> bn3
    h3 = jnp.dot(out2, p3_ref[...], preferred_element_type=jnp.float32)
    out3 = h3 * s3_ref[...] + b3_ref[...]                      # (H, W*Cin)

    # residual add + relu
    o_ref[0] = jnp.maximum(out3 + x, 0.0)


def build_band_weights(w_hwio, W):
    """Fold a (3,3,Cin,Cout) HWIO 3x3 kernel into a (3*W*Cin, W*Cout)
    block-banded matrix so a SAME-padded conv along width becomes a plain
    matmul on rows flattened to (W*Cin,). Width zero-padding is implicit in
    the zero blocks of the band."""
    Cin, Cout = w_hwio.shape[2], w_hwio.shape[3]
    bands = []
    for dy in range(3):
        B = jnp.zeros((W, Cin, W, Cout), jnp.float32)
        for dx in range(3):
            # input column wi feeds output column xo when wi = xo + dx - 1
            E = jnp.eye(W, k=-(dx - 1), dtype=jnp.float32)     # E[wi, xo]
            B = B + E[:, None, :, None] * w_hwio[dy, dx][None, :, None, :]
        bands.append(B.reshape(W * Cin, W * Cout))
    return jnp.concatenate(bands, axis=0)                      # (3*W*Cin, W*Cout)


def build_pointwise_band(w_io, W):
    """Fold a (Cin, Cout) 1x1 conv into a block-diagonal (W*Cin, W*Cout)
    matrix for the lane-flattened (H, W*C) layout."""
    Cin, Cout = w_io.shape
    E = jnp.eye(W, dtype=jnp.float32)
    B = E[:, None, :, None] * w_io[None, :, None, :]           # (W,Cin,W,Cout)
    return B.reshape(W * Cin, W * Cout)


def _tile_lanes(v, W):
    return jnp.tile(v.reshape(-1).astype(jnp.float32), W).reshape(1, -1)


def bottleneck_block(x_nchw, w1, s1, b1, w2, s2, b2, w3, s3, b3):
    """Fused Bottleneck forward.
    x_nchw: (N, Cin, H, W) f32;  w1: (Cin, Cmid) 1x1;  w2: (3,3,Cmid,Cmid)
    HWIO;  w3: (Cmid, Cin) 1x1;  s*/b*: folded BN scale/bias.  Returns NCHW."""
    N, C, H, W = x_nchw.shape
    Cmid = w1.shape[1]
    assert w3.shape[1] == C, "downsample=None requires inplanes == planes*4"
    WCin, WCmid = W * C, W * Cmid

    x = jnp.transpose(x_nchw, (0, 2, 3, 1)).astype(jnp.float32)   # (N,H,W,C)
    x = x.reshape(N, H, WCin)

    p1 = build_pointwise_band(w1.astype(jnp.float32), W)          # (WCin, WCmid)
    wb2 = build_band_weights(w2.astype(jnp.float32), W)           # (3*WCmid, WCmid)
    p3 = build_pointwise_band(w3.astype(jnp.float32), W)          # (WCmid, WCin)
    s1f, b1f = _tile_lanes(s1, W), _tile_lanes(b1, W)              # (1, WCmid)
    s2f, b2f = _tile_lanes(s2, W), _tile_lanes(b2, W)              # (1, WCmid)
    s3f, b3f = _tile_lanes(s3, W), _tile_lanes(b3, W)              # (1, WCin)

    out = pl.pallas_call(
        bottleneck_kernel,
        out_shape=jax.ShapeDtypeStruct((N, H, WCin), jnp.float32),
        grid_spec=pltpu.PrefetchScalarGridSpec(
            num_scalar_prefetch=0,
            grid=(N,),
            in_specs=[
                pl.BlockSpec((1, H, WCin), lambda n: (n, 0, 0)),
                pl.BlockSpec((WCin, WCmid), lambda n: (0, 0)),
                pl.BlockSpec((1, WCmid), lambda n: (0, 0)),
                pl.BlockSpec((1, WCmid), lambda n: (0, 0)),
                pl.BlockSpec((3 * WCmid, WCmid), lambda n: (0, 0)),
                pl.BlockSpec((1, WCmid), lambda n: (0, 0)),
                pl.BlockSpec((1, WCmid), lambda n: (0, 0)),
                pl.BlockSpec((WCmid, WCin), lambda n: (0, 0)),
                pl.BlockSpec((1, WCin), lambda n: (0, 0)),
                pl.BlockSpec((1, WCin), lambda n: (0, 0)),
            ],
            out_specs=pl.BlockSpec((1, H, WCin), lambda n: (n, 0, 0)),
        ),
        compiler_params=pltpu.CompilerParams(
            dimension_semantics=("parallel",)),
    )(x, p1, s1f, b1f, wb2, s2f, b2f, p3, s3f, b3f)

    out = out.reshape(N, H, W, C)
    return jnp.transpose(out, (0, 3, 1, 2))                        # NCHW


# ----------------------------------------------------------------------------
# Kernel 2: MIL head — MaxPool2d(7) -> Linear(2048,1000) -> ReLU
#           (-> Dropout, inference no-op) -> noisy-OR / max combine.
# ----------------------------------------------------------------------------
def mil_head_kernel(x_ref, w_ref, b_ref, o_ref):
    # x_ref : (1, S_pad, C)  trunk feature map, spatial flattened, -inf padded
    # w_ref : (C, Kp)        linear weight, outputs padded to lane multiple
    # b_ref : (1, Kp)
    # o_ref : (1, Kp)
    feat = jnp.max(x_ref[0], axis=0, keepdims=True)            # (1, C) max-pool
    x = jnp.dot(feat, w_ref[...], preferred_element_type=jnp.float32)
    x = jnp.maximum(x + b_ref[...], 0.0)                       # Linear + ReLU
    # noisy-OR over the (singleton) instance axis of x.view(B, 1000, -1):
    # cumprod(1 - x)[..., -1] == 1 - x, then combine with max.
    cumprod_last = 1.0 - x
    o_ref[...] = jnp.maximum(x, 1.0 - cumprod_last)


def mil_head(x0_nchw, w, b):
    """x0_nchw: (B, C, Hs, Ws) trunk features; w: (C, K) linear weight
    (PyTorch weight transposed); b: (K,). Returns (B, K)."""
    B, C, Hs, Ws = x0_nchw.shape
    K = w.shape[1]
    S = Hs * Ws
    Sp = ((S + 7) // 8) * 8
    Kp = ((K + 127) // 128) * 128

    x = jnp.transpose(x0_nchw, (0, 2, 3, 1)).astype(jnp.float32)
    x = x.reshape(B, S, C)
    # pad spatial rows with -inf so the padded rows never win the max
    x = jnp.pad(x, ((0, 0), (0, Sp - S), (0, 0)), constant_values=-jnp.inf)
    wp = jnp.pad(w.astype(jnp.float32), ((0, 0), (0, Kp - K)))
    bp = jnp.pad(b.astype(jnp.float32), (0, Kp - K)).reshape(1, Kp)

    out = pl.pallas_call(
        mil_head_kernel,
        out_shape=jax.ShapeDtypeStruct((B, Kp), jnp.float32),
        grid_spec=pltpu.PrefetchScalarGridSpec(
            num_scalar_prefetch=0,
            grid=(B,),
            in_specs=[
                pl.BlockSpec((1, Sp, C), lambda n: (n, 0, 0)),
                pl.BlockSpec((C, Kp), lambda n: (0, 0)),
                pl.BlockSpec((1, Kp), lambda n: (0, 0)),
            ],
            out_specs=pl.BlockSpec((1, Kp), lambda n: (n, 0)),
        ),
        compiler_params=pltpu.CompilerParams(
            dimension_semantics=("parallel",),
            vmem_limit_bytes=32 * 1024 * 1024),   # f32 weight is double-buffered
    )(x, wp, bp)
    return out[:, :K]


# ----------------------------------------------------------------------------
# Pure-JAX references.
# ----------------------------------------------------------------------------
def ref_bottleneck(x_nchw, w1, s1, b1, w2, s2, b2, w3, s3, b3):
    dn = ('NHWC', 'HWIO', 'NHWC')
    x = jnp.transpose(x_nchw, (0, 2, 3, 1))
    out = lax.conv_general_dilated(x, w1[None, None], (1, 1), 'SAME',
                                   dimension_numbers=dn)
    out = jnp.maximum(out * s1 + b1, 0.0)
    out = lax.conv_general_dilated(out, w2, (1, 1), 'SAME',
                                   dimension_numbers=dn)
    out = jnp.maximum(out * s2 + b2, 0.0)
    out = lax.conv_general_dilated(out, w3[None, None], (1, 1), 'SAME',
                                   dimension_numbers=dn)
    out = out * s3 + b3
    out = jnp.maximum(out + x, 0.0)
    return jnp.transpose(out, (0, 3, 1, 2))


def ref_mil_head(x0_nchw, w, b):
    B, C = x0_nchw.shape[:2]
    pooled = jnp.max(x0_nchw.reshape(B, C, -1), axis=-1)       # MaxPool2d(7)+squeeze
    xlin = jnp.maximum(pooled @ w + b, 0.0)                    # Linear + ReLU
    x1 = 1.0 - xlin[:, :, None]
    cum = jnp.cumprod(x1, axis=2)
    return jnp.maximum(xlin, 1.0 - cum[:, :, -1])


if __name__ == "__main__":
    key = jax.random.PRNGKey(0)
    ks = jax.random.split(key, 13)
    eps = 1e-5

    # ------------------ Bottleneck residual block (trunk) -------------------
    N, Cmid, H, W = 2, 8, 16, 16
    Cin = Cmid * 4                                              # expansion = 4
    x = jax.random.normal(ks[0], (N, Cin, H, W), jnp.float32)
    w1 = 0.1 * jax.random.normal(ks[1], (Cin, Cmid), jnp.float32)        # 1x1
    w2 = 0.1 * jax.random.normal(ks[2], (3, 3, Cmid, Cmid), jnp.float32)  # 3x3
    w3 = 0.1 * jax.random.normal(ks[3], (Cmid, Cin), jnp.float32)        # 1x1

    def bn_fold(kg, kb, C):
        gamma = 1.0 + 0.1 * jax.random.normal(kg, (C,), jnp.float32)
        beta = 0.1 * jax.random.normal(kb, (C,), jnp.float32)
        mean, var = jnp.zeros((C,), jnp.float32), jnp.ones((C,), jnp.float32)
        s = gamma / jnp.sqrt(var + eps)
        return s, beta - mean * s

    s1, b1 = bn_fold(ks[4], ks[5], Cmid)
    s2, b2 = bn_fold(ks[6], ks[7], Cmid)
    s3, b3 = bn_fold(ks[8], ks[9], Cin)

    out_block = bottleneck_block(x, w1, s1, b1, w2, s2, b2, w3, s3, b3)
    jax.block_until_ready(out_block)
    ref_block = ref_bottleneck(x, w1, s1, b1, w2, s2, b2, w3, s3, b3)
    if not jnp.allclose(out_block, ref_block, atol=5e-3, rtol=5e-3):
        raise AssertionError(
            "Pallas Bottleneck mismatch vs reference: max abs err "
            f"{float(jnp.max(jnp.abs(out_block - ref_block)))}")

    # ------------------------------ MIL head --------------------------------
    B, C, Hs, Ws, K = 2, 2048, 7, 7, 1000
    x0 = jax.random.normal(ks[10], (B, C, Hs, Ws), jnp.float32)
    wl = (1.0 / jnp.sqrt(C)) * jax.random.normal(ks[11], (C, K), jnp.float32)
    bl = 0.1 * jax.random.normal(ks[12], (K,), jnp.float32)

    out_head = mil_head(x0, wl, bl)
    jax.block_until_ready(out_head)
    ref_head = ref_mil_head(x0, wl, bl)
    if not jnp.allclose(out_head, ref_head, atol=1e-2, rtol=1e-2):
        raise AssertionError(
            "Pallas MIL head mismatch vs reference: max abs err "
            f"{float(jnp.max(jnp.abs(out_head - ref_head)))}")

    print("KERNEL_OK")
</pallas_src>

<mosaic_0001>
module attributes {stable_mosaic.version = 11 : i64} {
  func.func @bottleneck_kernel(%arg0: i32, %arg1: memref<1x16x512xf32, #tpu.memory_space<vmem>>, %arg2: memref<512x128xf32, #tpu.memory_space<vmem>>, %arg3: memref<1x128xf32, #tpu.memory_space<vmem>>, %arg4: memref<1x128xf32, #tpu.memory_space<vmem>>, %arg5: memref<384x128xf32, #tpu.memory_space<vmem>>, %arg6: memref<1x128xf32, #tpu.memory_space<vmem>>, %arg7: memref<1x128xf32, #tpu.memory_space<vmem>>, %arg8: memref<128x512xf32, #tpu.memory_space<vmem>>, %arg9: memref<1x512xf32, #tpu.memory_space<vmem>>, %arg10: memref<1x512xf32, #tpu.memory_space<vmem>>, %arg11: memref<1x16x512xf32, #tpu.memory_space<vmem>>) attributes {dimension_semantics = [#tpu.dimension_semantics<parallel>], iteration_bounds = array<i64: 2>, scalar_prefetch = 0 : i64, scratch_operands = 0 : i64, tpu.core_type = #tpu.core_type<tc>, window_params = [{transform_indices = @transform_0, window_bounds = array<i64: 1, 16, 512>}, {pipeline_mode = #tpu.pipeline_mode<synchronous>, transform_indices = @transform_1, window_bounds = array<i64: 512, 128>}, {pipeline_mode = #tpu.pipeline_mode<synchronous>, transform_indices = @transform_2, window_bounds = array<i64: 1, 128>}, {pipeline_mode = #tpu.pipeline_mode<synchronous>, transform_indices = @transform_3, window_bounds = array<i64: 1, 128>}, {pipeline_mode = #tpu.pipeline_mode<synchronous>, transform_indices = @transform_4, window_bounds = array<i64: 384, 128>}, {pipeline_mode = #tpu.pipeline_mode<synchronous>, transform_indices = @transform_5, window_bounds = array<i64: 1, 128>}, {pipeline_mode = #tpu.pipeline_mode<synchronous>, transform_indices = @transform_6, window_bounds = array<i64: 1, 128>}, {pipeline_mode = #tpu.pipeline_mode<synchronous>, transform_indices = @transform_7, window_bounds = array<i64: 128, 512>}, {pipeline_mode = #tpu.pipeline_mode<synchronous>, transform_indices = @transform_8, window_bounds = array<i64: 1, 512>}, {pipeline_mode = #tpu.pipeline_mode<synchronous>, transform_indices = @transform_9, window_bounds = array<i64: 1, 512>}, {transform_indices = @transform_10, window_bounds = array<i64: 1, 16, 512>}]} {
    %c0 = arith.constant 0 : index
    %c0_0 = arith.constant 0 : index
    %c0_1 = arith.constant 0 : index
    %0 = vector.load %arg1[%c0, %c0_0, %c0_1] : memref<1x16x512xf32, #tpu.memory_space<vmem>>, vector<1x16x512xf32>
    %1 = vector.shape_cast %0 : vector<1x16x512xf32> to vector<16x512xf32>
    %c0_2 = arith.constant 0 : index
    %c0_3 = arith.constant 0 : index
    %2 = vector.load %arg2[%c0_2, %c0_3] : memref<512x128xf32, #tpu.memory_space<vmem>>, vector<512x128xf32>
    %cst = arith.constant dense<0.000000e+00> : vector<16x128xf32>
    %3 = tpu.matmul %1, %2, %cst {dimension_numbers = #tpu.dot_dimension_numbers<[1], [0], [0], [1], [0, 0, 1, 1], [], []>} : vector<16x512xf32>, vector<512x128xf32>, vector<16x128xf32> -> vector<16x128xf32>
    %c0_4 = arith.constant 0 : index
    %c0_5 = arith.constant 0 : index
    %4 = vector.load %arg3[%c0_4, %c0_5] : memref<1x128xf32, #tpu.memory_space<vmem>>, vector<1x128xf32>
    %5 = vector.broadcast %4 : vector<1x128xf32> to vector<16x128xf32>
    %6 = arith.mulf %3, %5 : vector<16x128xf32>
    %c0_6 = arith.constant 0 : index
    %c0_7 = arith.constant 0 : index
    %7 = vector.load %arg4[%c0_6, %c0_7] : memref<1x128xf32, #tpu.memory_space<vmem>>, vector<1x128xf32>
    %8 = vector.broadcast %7 : vector<1x128xf32> to vector<16x128xf32>
    %9 = arith.addf %6, %8 : vector<16x128xf32>
    %cst_8 = arith.constant 0.000000e+00 : f32
    %10 = vector.broadcast %cst_8 : f32 to vector<16x128xf32>
    %11 = arith.maximumf %9, %10 : vector<16x128xf32>
    %cst_9 = arith.constant 0.000000e+00 : f32
    %12 = vector.broadcast %cst_9 : f32 to vector<1x128xf32>
    %13 = tpu.concatenate %12, %11, %12 in 0 : vector<1x128xf32>, vector<16x128xf32>, vector<1x128xf32> -> vector<18x128xf32>
    %14 = vector.extract_strided_slice %13 {offsets = [0, 0], sizes = [16, 128], strides = [1, 1]} : vector<18x128xf32> to vector<16x128xf32>
    %15 = vector.extract_strided_slice %13 {offsets = [1, 0], sizes = [16, 128], strides = [1, 1]} : vector<18x128xf32> to vector<16x128xf32>
    %16 = vector.extract_strided_slice %13 {offsets = [2, 0], sizes = [16, 128], strides = [1, 1]} : vector<18x128xf32> to vector<16x128xf32>
    %17 = tpu.concatenate %14, %15, %16 in 1 : vector<16x128xf32>, vector<16x128xf32>, vector<16x128xf32> -> vector<16x384xf32>
    %c0_10 = arith.constant 0 : index
    %c0_11 = arith.constant 0 : index
    %18 = vector.load %arg5[%c0_10, %c0_11] : memref<384x128xf32, #tpu.memory_space<vmem>>, vector<384x128xf32>
    %cst_12 = arith.constant dense<0.000000e+00> : vector<16x128xf32>
    %19 = tpu.matmul %17, %18, %cst_12 {dimension_numbers = #tpu.dot_dimension_numbers<[1], [0], [0], [1], [0, 0, 1, 1], [], []>} : vector<16x384xf32>, vector<384x128xf32>, vector<16x128xf32> -> vector<16x128xf32>
    %c0_13 = arith.constant 0 : index
    %c0_14 = arith.constant 0 : index
    %20 = vector.load %arg6[%c0_13, %c0_14] : memref<1x128xf32, #tpu.memory_space<vmem>>, vector<1x128xf32>
    %21 = vector.broadcast %20 : vector<1x128xf32> to vector<16x128xf32>
    %22 = arith.mulf %19, %21 : vector<16x128xf32>
    %c0_15 = arith.constant 0 : index
    %c0_16 = arith.constant 0 : index
    %23 = vector.load %arg7[%c0_15, %c0_16] : memref<1x128xf32, #tpu.memory_space<vmem>>, vector<1x128xf32>
    %24 = vector.broadcast %23 : vector<1x128xf32> to vector<16x128xf32>
    %25 = arith.addf %22, %24 : vector<16x128xf32>
    %cst_17 = arith.constant 0.000000e+00 : f32
    %26 = vector.broadcast %cst_17 : f32 to vector<16x128xf32>
    %27 = arith.maximumf %25, %26 : vector<16x128xf32>
    %c0_18 = arith.constant 0 : index
    %c0_19 = arith.constant 0 : index
    %28 = vector.load %arg8[%c0_18, %c0_19] : memref<128x512xf32, #tpu.memory_space<vmem>>, vector<128x512xf32>
    %cst_20 = arith.constant dense<0.000000e+00> : vector<16x512xf32>
    %29 = tpu.matmul %27, %28, %cst_20 {dimension_numbers = #tpu.dot_dimension_numbers<[1], [0], [0], [1], [0, 0, 1, 1], [], []>} : vector<16x128xf32>, vector<128x512xf32>, vector<16x512xf32> -> vector<16x512xf32>
    %c0_21 = arith.constant 0 : index
    %c0_22 = arith.constant 0 : index
    %30 = vector.load %arg9[%c0_21, %c0_22] : memref<1x512xf32, #tpu.memory_space<vmem>>, vector<1x512xf32>
    %31 = vector.broadcast %30 : vector<1x512xf32> to vector<16x512xf32>
    %32 = arith.mulf %29, %31 : vector<16x512xf32>
    %c0_23 = arith.constant 0 : index
    %c0_24 = arith.constant 0 : index
    %33 = vector.load %arg10[%c0_23, %c0_24] : memref<1x512xf32, #tpu.memory_space<vmem>>, vector<1x512xf32>
    %34 = vector.broadcast %33 : vector<1x512xf32> to vector<16x512xf32>
    %35 = arith.addf %32, %34 : vector<16x512xf32>
    %36 = arith.addf %35, %1 : vector<16x512xf32>
    %cst_25 = arith.constant 0.000000e+00 : f32
    %37 = vector.broadcast %cst_25 : f32 to vector<16x512xf32>
    %38 = arith.maximumf %36, %37 : vector<16x512xf32>
    %c0_26 = arith.constant 0 : index
    %c0_27 = arith.constant 0 : index
    %c0_28 = arith.constant 0 : index
    %39 = vector.load %arg11[%c0_26, %c0_27, %c0_28] : memref<1x16x512xf32, #tpu.memory_space<vmem>>, vector<1x16x512xf32>
    %40 = vector.shape_cast %39 : vector<1x16x512xf32> to vector<16x512xf32>
    %41 = vector.shape_cast %38 : vector<16x512xf32> to vector<1x16x512xf32>
    tpu.vector_store %arg11[%c0_26, %c0_27, %c0_28], %41 {strides = array<i32>} : memref<1x16x512xf32, #tpu.memory_space<vmem>>, vector<1x16x512xf32>,
    return
  }
  func.func @transform_0(%arg0: i32) -> (i32, i32, i32) {
    %c0_i32 = arith.constant 0 : i32
    %c0_i32_0 = arith.constant 0 : i32
    %c0_i32_1 = arith.constant 0 : i32
    return %arg0, %c0_i32, %c0_i32_0 : i32, i32, i32
  }
  func.func @transform_1(%arg0: i32) -> (i32, i32) {
    %c0_i32 = arith.constant 0 : i32
    %c0_i32_0 = arith.constant 0 : i32
    %c0_i32_1 = arith.constant 0 : i32
    return %c0_i32, %c0_i32_0 : i32, i32
  }
  func.func @transform_2(%arg0: i32) -> (i32, i32) {
    %c0_i32 = arith.constant 0 : i32
    %c0_i32_0 = arith.constant 0 : i32
    %c0_i32_1 = arith.constant 0 : i32
    return %c0_i32, %c0_i32_0 : i32, i32
  }
  func.func @transform_3(%arg0: i32) -> (i32, i32) {
    %c0_i32 = arith.constant 0 : i32
    %c0_i32_0 = arith.constant 0 : i32
    %c0_i32_1 = arith.constant 0 : i32
    return %c0_i32, %c0_i32_0 : i32, i32
  }
  func.func @transform_4(%arg0: i32) -> (i32, i32) {
    %c0_i32 = arith.constant 0 : i32
    %c0_i32_0 = arith.constant 0 : i32
    %c0_i32_1 = arith.constant 0 : i32
    return %c0_i32, %c0_i32_0 : i32, i32
  }
  func.func @transform_5(%arg0: i32) -> (i32, i32) {
    %c0_i32 = arith.constant 0 : i32
    %c0_i32_0 = arith.constant 0 : i32
    %c0_i32_1 = arith.constant 0 : i32
    return %c0_i32, %c0_i32_0 : i32, i32
  }
  func.func @transform_6(%arg0: i32) -> (i32, i32) {
    %c0_i32 = arith.constant 0 : i32
    %c0_i32_0 = arith.constant 0 : i32
    %c0_i32_1 = arith.constant 0 : i32
    return %c0_i32, %c0_i32_0 : i32, i32
  }
  func.func @transform_7(%arg0: i32) -> (i32, i32) {
    %c0_i32 = arith.constant 0 : i32
    %c0_i32_0 = arith.constant 0 : i32
    %c0_i32_1 = arith.constant 0 : i32
    return %c0_i32, %c0_i32_0 : i32, i32
  }
  func.func @transform_8(%arg0: i32) -> (i32, i32) {
    %c0_i32 = arith.constant 0 : i32
    %c0_i32_0 = arith.constant 0 : i32
    %c0_i32_1 = arith.constant 0 : i32
    return %c0_i32, %c0_i32_0 : i32, i32
  }
  func.func @transform_9(%arg0: i32) -> (i32, i32) {
    %c0_i32 = arith.constant 0 : i32
    %c0_i32_0 = arith.constant 0 : i32
    %c0_i32_1 = arith.constant 0 : i32
    return %c0_i32, %c0_i32_0 : i32, i32
  }
  func.func @transform_10(%arg0: i32) -> (i32, i32, i32) {
    %c0_i32 = arith.constant 0 : i32
    %c0_i32_0 = arith.constant 0 : i32
    %c0_i32_1 = arith.constant 0 : i32
    return %arg0, %c0_i32, %c0_i32_0 : i32, i32, i32
  }
}

</mosaic_0001>

<llo_original>
// kernel: tpu_custom_call.1
$region0: #{tpu_custom_call.1}
  #allocation0 [shape = 'u32[]', space=smem, size = 0x4, offset = 0x4, fixed_abs, tag = 'smem constant byte address 0x4 - core index']
  #allocation1 [shape = 'u32[144,128]{1,0:T(1,128)}', space=vmem, size = 0x12000, scoped, tag = 'internal scratch']
  %s0 = inlined_call_operand.hbm [shape: f32[2,16,512], index: 0, kind: input, shape index: {}]
  %s1 = inlined_call_operand.hbm [shape: f32[512,128], index: 1, kind: input, shape index: {}]
  %s2 = inlined_call_operand.vmem [shape: f32[1,128], index: 2, kind: input, shape index: {}]
  %s3 = inlined_call_operand.vmem [shape: f32[1,128], index: 3, kind: input, shape index: {}]
  %s4 = inlined_call_operand.hbm [shape: f32[384,128], index: 4, kind: input, shape index: {}]
  %s5 = inlined_call_operand.vmem [shape: f32[1,128], index: 5, kind: input, shape index: {}]
  %s6 = inlined_call_operand.vmem [shape: f32[1,128], index: 6, kind: input, shape index: {}]
  %s7 = inlined_call_operand.hbm [shape: f32[128,512], index: 7, kind: input, shape index: {}]
  %s8 = inlined_call_operand.vmem [shape: f32[1,512], index: 8, kind: input, shape index: {}]
  %s9 = inlined_call_operand.vmem [shape: f32[1,512], index: 9, kind: input, shape index: {}]
  %s10 = inlined_call_operand.hbm [shape: f32[2,16,512], index: 10, kind: output, shape index: {}]
  %s11 = sld [smem:[#allocation0]]
  $region89: #{tpu_custom_call.1} parent=0
    _
  %s13 = ssub.s32 1, %s11
  %s14 = scalar_select 0, %s13, %s11
  $region1: #{tpu_custom_call.1} parent=0
    #allocation2 [shape = 'u8[65536]{0}', space=vmem, size = 0x10000, scoped, tag = 'input window, operand 0']
    #allocation3 [shape = 's32[2]{0}', space=sflag, size = 0x8, scoped, tag = 'scoped memory for tpu_custom_call.1']
    #allocation4 [shape = 's32[2]{0}', space=sflag, size = 0x8, scoped, tag = 'scoped memory for tpu_custom_call.1']
    #allocation5 [shape = 'u8[262144]{0}', space=vmem, size = 0x40000, scoped, tag = 'input window, operand 1, single buffered']
    #allocation6 [shape = 's32[1]{0}', space=sflag, size = 0x4, scoped, tag = 'scoped memory for tpu_custom_call.1']
    #allocation7 [shape = 'u8[196608]{0}', space=vmem, size = 0x30000, scoped, tag = 'input window, operand 4, single buffered']
    #allocation8 [shape = 'u8[262144]{0}', space=vmem, size = 0x40000, scoped, tag = 'input window, operand 7, single buffered']
    #allocation9 [shape = 's32[1]{0}', space=sflag, size = 0x4, scoped, tag = 'scoped memory for tpu_custom_call.1']
    #allocation10 [shape = 'u8[65536]{0}', space=vmem, size = 0x10000, scoped, tag = 'output window, operand 0']
    %15 = vsyncpa [#allocation3], 0
    %s16 = scalar_lea.sflag [#allocation3], 1
    %17 = vsyncpa %s16, 0
    %18 = vsyncpa [#allocation6], 0
    %19 = vsyncpa [#allocation9], 0
    %20 = vsyncpa [#allocation4], 0
    %s21 = scalar_lea.sflag [#allocation4], 1
    %22 = vsyncpa %s21, 0
    loop: start=0, step=1, limit=4
    $region2: #{tpu_custom_call.1} parent=1 // loop_pre_header
      _
    $region3: #{tpu_custom_call.1} parent=1 // loop_header
      %s24 = sphi 0, %s28
      %p25 = scmp.ge.s32.totalorder %s24, 4
      %s34 = sphi 0, %s36
      %s37 = sphi 0, %s34
      %s38 = sphi 0, %s37
      %s54 = sphi 0, %s38
      %s58 = sphi 0, %s58
      %s60 = sphi 0, %s58
      %s61 = sphi 0, %s60
      %s75 = sphi 0, %s61
      %s79 = sphi 0, %s79
      %s81 = sphi 0, %s79
      %s82 = sphi 0, %s81
      %s96 = sphi 0, %s82
      %s100 = sphi 0, %s100
      %s102 = sphi 0, %s100
      %s103 = sphi 0, %s102
      %s117 = sphi 0, %s103
      %s121 = sphi 0, %s121
      %s123 = sphi 0, %s121
      %s124 = sphi 0, %s123
      %s138 = sphi 0, %s124
      %s142 = sphi 0, %s142
      %s144 = sphi 0, %s142
      %s145 = sphi 0, %s144
      %s159 = sphi 0, %s145
      %s163 = sphi 0, %s163
      %s165 = sphi 0, %s163
      %s166 = sphi 0, %s165
      %s180 = sphi 0, %s166
      %s184 = sphi 0, %s184
      %s186 = sphi 0, %s184
      %s187 = sphi 0, %s186
      %s201 = sphi 0, %s187
      %s205 = sphi 0, %s205
      %s207 = sphi 0, %s205
      %s208 = sphi 0, %s207
      %s222 = sphi 0, %s208
      %s226 = sphi 0, %s226
      %s228 = sphi 0, %s226
      %s229 = sphi 0, %s228
      %s243 = sphi 0, %s229
      %s249 = sphi 0, %s251
      %s252 = sphi 0, %s249
      %s253 = sphi 0, %s252
      %s269 = sphi 0, %s253
    $region4: #{tpu_custom_call.1} parent=1 // loop_header_branch
      %27 = sbr.rel (%p25) target = $region8
    $region5: #{tpu_custom_call.1} parent=1 // loop_body
      %s29 = ssub.s32 %s24, 1
      %s30 = ssub.s32 %s24, 2
      %s31 = sadd.s32 %s24, 1
      %s32 = ssub.s32 %s24, %s31
      %p33 = scmp.eq.s32.totalorder %s32, 0
      %s35 = sadd.s32 %s34, 1
      %s36 = scalar_select %p33, %s34, %s35
      %p39 = pneg %p33
      %p40 = scmp.eq.s32.totalorder %s24, 1
      %p41 = por %p39, %p40
      %p42 = scmp.ne.s32.totalorder %s34, %s37
      %p43 = scmp.eq.s32.totalorder %s24, 0
      %p44 = por %p42, %p43
      %p45 = scmp.ne.s32.totalorder %s34, %s37
      %p46 = scmp.eq.s32.totalorder %s29, 1
      %p47 = por %p45, %p46
      %p48 = scmp.ne.s32.totalorder %s37, %s38
      %p49 = scmp.eq.s32.totalorder %s29, 0
      %p50 = por %p48, %p49
      %p51 = scmp.ne.s32.totalorder %s37, %s38
      %p52 = scmp.eq.s32.totalorder %s30, 1
      %p53 = por %p51, %p52
      %p55 = scmp.ne.s32.totalorder %s38, %s54
      %p56 = scmp.eq.s32.totalorder %s30, 0
      %p57 = por %p55, %p56
      %s59 = sadd.s32 %s58, 1
      %p62 = scmp.eq.s32.totalorder %s24, 1
      %p63 = scmp.ne.s32.totalorder %s58, %s60
      %p64 = scmp.eq.s32.totalorder %s24, 0
      %p65 = por %p63, %p64
      %p66 = scmp.ne.s32.totalorder %s58, %s60
      %p67 = scmp.eq.s32.totalorder %s29, 1
      %p68 = por %p66, %p67
      %p69 = scmp.ne.s32.totalorder %s60, %s61
      %p70 = scmp.eq.s32.totalorder %s29, 0
      %p71 = por %p69, %p70
      %p72 = scmp.ne.s32.totalorder %s60, %s61
      %p73 = scmp.eq.s32.totalorder %s30, 1
      %p74 = por %p72, %p73
      %p76 = scmp.ne.s32.totalorder %s61, %s75
      %p77 = scmp.eq.s32.totalorder %s30, 0
      %p78 = por %p76, %p77
      %s80 = sadd.s32 %s79, 1
      %p83 = scmp.eq.s32.totalorder %s24, 1
      %p84 = scmp.ne.s32.totalorder %s79, %s81
      %p85 = scmp.eq.s32.totalorder %s24, 0
      %p86 = por %p84, %p85
      %p87 = scmp.ne.s32.totalorder %s79, %s81
      %p88 = scmp.eq.s32.totalorder %s29, 1
      %p89 = por %p87, %p88
      %p90 = scmp.ne.s32.totalorder %s81, %s82
      %p91 = scmp.eq.s32.totalorder %s29, 0
      %p92 = por %p90, %p91
      %p93 = scmp.ne.s32.totalorder %s81, %s82
      %p94 = scmp.eq.s32.totalorder %s30, 1
      %p95 = por %p93, %p94
      %p97 = scmp.ne.s32.totalorder %s82, %s96
      %p98 = scmp.eq.s32.totalorder %s30, 0
      %p99 = por %p97, %p98
      %s101 = sadd.s32 %s100, 1
      %p104 = scmp.eq.s32.totalorder %s24, 1
      %p105 = scmp.ne.s32.totalorder %s100, %s102
      %p106 = scmp.eq.s32.totalorder %s24, 0
      %p107 = por %p105, %p106
      %p108 = scmp.ne.s32.totalorder %s100, %s102
      %p109 = scmp.eq.s32.totalorder %s29, 1
      %p110 = por %p108, %p109
      %p111 = scmp.ne.s32.totalorder %s102, %s103
      %p112 = scmp.eq.s32.totalorder %s29, 0
      %p113 = por %p111, %p112
      %p114 = scmp.ne.s32.totalorder %s102, %s103
      %p115 = scmp.eq.s32.totalorder %s30, 1
      %p116 = por %p114, %p115
      %p118 = scmp.ne.s32.totalorder %s103, %s117
      %p119 = scmp.eq.s32.totalorder %s30, 0
      %p120 = por %p118, %p119
      %s122 = sadd.s32 %s121, 1
      %p125 = scmp.eq.s32.totalorder %s24, 1
      %p126 = scmp.ne.s32.totalorder %s121, %s123
      %p127 = scmp.eq.s32.totalorder %s24, 0
      %p128 = por %p126, %p127
      %p129 = scmp.ne.s32.totalorder %s121, %s123
      %p130 = scmp.eq.s32.totalorder %s29, 1
      %p131 = por %p129, %p130
      %p132 = scmp.ne.s32.totalorder %s123, %s124
      %p133 = scmp.eq.s32.totalorder %s29, 0
      %p134 = por %p132, %p133
      %p135 = scmp.ne.s32.totalorder %s123, %s124
      %p136 = scmp.eq.s32.totalorder %s30, 1
      %p137 = por %p135, %p136
      %p139 = scmp.ne.s32.totalorder %s124, %s138
      %p140 = scmp.eq.s32.totalorder %s30, 0
      %p141 = por %p139, %p140
      %s143 = sadd.s32 %s142, 1
      %p146 = scmp.eq.s32.totalorder %s24, 1
      %p147 = scmp.ne.s32.totalorder %s142, %s144
      %p148 = scmp.eq.s32.totalorder %s24, 0
      %p149 = por %p147, %p148
      %p150 = scmp.ne.s32.totalorder %s142, %s144
      %p151 = scmp.eq.s32.totalorder %s29, 1
      %p152 = por %p150, %p151
      %p153 = scmp.ne.s32.totalorder %s144, %s145
      %p154 = scmp.eq.s32.totalorder %s29, 0
      %p155 = por %p153, %p154
      %p156 = scmp.ne.s32.totalorder %s144, %s145
      %p157 = scmp.eq.s32.totalorder %s30, 1
      %p158 = por %p156, %p157
      %p160 = scmp.ne.s32.totalorder %s145, %s159
      %p161 = scmp.eq.s32.totalorder %s30, 0
      %p162 = por %p160, %p161
      %s164 = sadd.s32 %s163, 1
      %p167 = scmp.eq.s32.totalorder %s24, 1
      %p168 = scmp.ne.s32.totalorder %s163, %s165
      %p169 = scmp.eq.s32.totalorder %s24, 0
      %p170 = por %p168, %p169
      %p171 = scmp.ne.s32.totalorder %s163, %s165
      %p172 = scmp.eq.s32.totalorder %s29, 1
      %p173 = por %p171, %p172
      %p174 = scmp.ne.s32.totalorder %s165, %s166
      %p175 = scmp.eq.s32.totalorder %s29, 0
      %p176 = por %p174, %p175
      %p177 = scmp.ne.s32.totalorder %s165, %s166
      %p178 = scmp.eq.s32.totalorder %s30, 1
      %p179 = por %p177, %p178
      %p181 = scmp.ne.s32.totalorder %s166, %s180
      %p182 = scmp.eq.s32.totalorder %s30, 0
      %p183 = por %p181, %p182
      %s185 = sadd.s32 %s184, 1
      %p188 = scmp.eq.s32.totalorder %s24, 1
      %p189 = scmp.ne.s32.totalorder %s184, %s186
      %p190 = scmp.eq.s32.totalorder %s24, 0
      %p191 = por %p189, %p190
      %p192 = scmp.ne.s32.totalorder %s184, %s186
      %p193 = scmp.eq.s32.totalorder %s29, 1
      %p194 = por %p192, %p193
      %p195 = scmp.ne.s32.totalorder %s186, %s187
      %p196 = scmp.eq.s32.totalorder %s29, 0
      %p197 = por %p195, %p196
      %p198 = scmp.ne.s32.totalorder %s186, %s187
      %p199 = scmp.eq.s32.totalorder %s30, 1
      %p200 = por %p198, %p199
      %p202 = scmp.ne.s32.totalorder %s187, %s201
      %p203 = scmp.eq.s32.totalorder %s30, 0
      %p204 = por %p202, %p203
      %s206 = sadd.s32 %s205, 1
      %p209 = scmp.eq.s32.totalorder %s24, 1
      %p210 = scmp.ne.s32.totalorder %s205, %s207
      %p211 = scmp.eq.s32.totalorder %s24, 0
      %p212 = por %p210, %p211
      %p213 = scmp.ne.s32.totalorder %s205, %s207
      %p214 = scmp.eq.s32.totalorder %s29, 1
      %p215 = por %p213, %p214
      %p216 = scmp.ne.s32.totalorder %s207, %s208
      %p217 = scmp.eq.s32.totalorder %s29, 0
      %p218 = por %p216, %p217
      %p219 = scmp.ne.s32.totalorder %s207, %s208
      %p220 = scmp.eq.s32.totalorder %s30, 1
      %p221 = por %p219, %p220
      %p223 = scmp.ne.s32.totalorder %s208, %s222
      %p224 = scmp.eq.s32.totalorder %s30, 0
      %p225 = por %p223, %p224
      %s227 = sadd.s32 %s226, 1
      %p230 = scmp.eq.s32.totalorder %s24, 1
      %p231 = scmp.ne.s32.totalorder %s226, %s228
      %p232 = scmp.eq.s32.totalorder %s24, 0
      %p233 = por %p231, %p232
      %p234 = scmp.ne.s32.totalorder %s226, %s228
      %p235 = scmp.eq.s32.totalorder %s29, 1
      %p236 = por %p234, %p235
      %p237 = scmp.ne.s32.totalorder %s228, %s229
      %p238 = scmp.eq.s32.totalorder %s29, 0
      %p239 = por %p237, %p238
      %p240 = scmp.ne.s32.totalorder %s228, %s229
      %p241 = scmp.eq.s32.totalorder %s30, 1
      %p242 = por %p240, %p241
      %p244 = scmp.ne.s32.totalorder %s229, %s243
      %p245 = scmp.eq.s32.totalorder %s30, 0
      %p246 = por %p244, %p245
      %s247 = ssub.s32 %s24, %s31
      %p248 = scmp.eq.s32.totalorder %s247, 0
      %s250 = sadd.s32 %s249, 1
      %s251 = scalar_select %p248, %s249, %s250
      %p254 = pneg %p248
      %p255 = scmp.eq.s32.totalorder %s24, 1
      %p256 = por %p254, %p255
      %p257 = scmp.ne.s32.totalorder %s249, %s252
      %p258 = scmp.eq.s32.totalorder %s24, 0
      %p259 = por %p257, %p258
      %p260 = scmp.ne.s32.totalorder %s249, %s252
      %p261 = scmp.eq.s32.totalorder %s29, 1
      %p262 = por %p260, %p261
      %p263 = scmp.ne.s32.totalorder %s252, %s253
      %p264 = scmp.eq.s32.totalorder %s29, 0
      %p265 = por %p263, %p264
      %p266 = scmp.ne.s32.totalorder %s252, %s253
      %p267 = scmp.eq.s32.totalorder %s30, 1
      %p268 = por %p266, %p267
      %p270 = scmp.ne.s32.totalorder %s253, %s269
      %p271 = scmp.eq.s32.totalorder %s30, 0
      %p272 = por %p270, %p271
      %p273 = scmp.le.s32.totalorder 1, %s24
      %p274 = scmp.lt.s32.totalorder %s24, 3
      %p275 = pnand %p273, %p274
      %p276 = pneg %p275
      // Predicated region
      $region9: #{tpu_custom_call.1} parent=5 // pred_check
        _
      $region10: #{tpu_custom_call.1} parent=5 // pred_check_branch
        %278 = sbr.rel (%p275) target = $region12
      $region11: #{tpu_custom_call.1} parent=5 // pred_region
        %s279 = ssub.s32 %s24, 1
        // Predicated region
        $region13: #{tpu_custom_call.1} parent=11 // pred_check
          %p280 = pneg %p71
        $region14: #{tpu_custom_call.1} parent=11 // pred_check_branch
          %282 = sbr.rel (%p280) target = $region16
        $region15: #{tpu_custom_call.1} parent=11 // pred_region
          %s284 = ssub.s32 8192, 8192
          %285 = vsyncadd [#allocation6], %s284
          %s286 = sshll.u32 [#allocation5], 4
          %s287 = int_to_ptr.vmem [resolvable:$true] %s286
          %292 = dma.hbm_to_vmem [thread:$0]  %s1, 8192, %s287, [#allocation6], 128, 128, 8
        $region16: #{tpu_custom_call.1} parent=11 // pred_fallthru
          _
        // Predicated region
        $region17: #{tpu_custom_call.1} parent=11 // pred_check
          %p293 = pneg %p92
        $region18: #{tpu_custom_call.1} parent=11 // pred_check_branch
          %295 = sbr.rel (%p293) target = $region20
        $region19: #{tpu_custom_call.1} parent=11 // pred_region
          _
        $region20: #{tpu_custom_call.1} parent=11 // pred_fallthru
          _
        // Predicated region
        $region21: #{tpu_custom_call.1} parent=11 // pred_check
          %p296 = pneg %p113
        $region22: #{tpu_custom_call.1} parent=11 // pred_check_branch
          %298 = sbr.rel (%p296) target = $region24
        $region23: #{tpu_custom_call.1} parent=11 // pred_region
          _
        $region24: #{tpu_custom_call.1} parent=11 // pred_fallthru
          _
        // Predicated region
        $region25: #{tpu_custom_call.1} parent=11 // pred_check
          %p299 = pneg %p134
        $region26: #{tpu_custom_call.1} parent=11 // pred_check_branch
          %301 = sbr.rel (%p299) target = $region28
        $region27: #{tpu_custom_call.1} parent=11 // pred_region
          %s303 = ssub.s32 6144, 6144
          %304 = vsyncadd [#allocation6], %s303
          %s305 = sshll.u32 [#allocation7], 4
          %s306 = int_to_ptr.vmem [resolvable:$true] %s305
          %311 = dma.hbm_to_vmem [thread:$0]  %s4, 6144, %s306, [#allocation6], 128, 128, 8
        $region28: #{tpu_custom_call.1} parent=11 // pred_fallthru
          _
        // Predicated region
        $region29: #{tpu_custom_call.1} parent=11 // pred_check
          %p312 = pneg %p155
        $region30: #{tpu_custom_call.1} parent=11 // pred_check_branch
          %314 = sbr.rel (%p312) target = $region32
        $region31: #{tpu_custom_call.1} parent=11 // pred_region
          _
        $region32: #{tpu_custom_call.1} parent=11 // pred_fallthru
          _
        // Predicated region
        $region33: #{tpu_custom_call.1} parent=11 // pred_check
          %p315 = pneg %p176
        $region34: #{tpu_custom_call.1} parent=11 // pred_check_branch
          %317 = sbr.rel (%p315) target = $region36
        $region35: #{tpu_custom_call.1} parent=11 // pred_region
          _
        $region36: #{tpu_custom_call.1} parent=11 // pred_fallthru
          _
        // Predicated region
        $region37: #{tpu_custom_call.1} parent=11 // pred_check
          %p318 = pneg %p197
        $region38: #{tpu_custom_call.1} parent=11 // pred_check_branch
          %320 = sbr.rel (%p318) target = $region40
        $region39: #{tpu_custom_call.1} parent=11 // pred_region
          %s322 = ssub.s32 8192, 8192
          %323 = vsyncadd [#allocation9], %s322
          %s324 = sshll.u32 [#allocation8], 4
          %s325 = int_to_ptr.vmem [resolvable:$true] %s324
          %330 = dma.hbm_to_vmem [thread:$0]  %s7, 8192, %s325, [#allocation9], 512, 512, 32
        $region40: #{tpu_custom_call.1} parent=11 // pred_fallthru
          _
        // Predicated region
        $region41: #{tpu_custom_call.1} parent=11 // pred_check
          %p331 = pneg %p218
        $region42: #{tpu_custom_call.1} parent=11 // pred_check_branch
          %333 = sbr.rel (%p331) target = $region44
        $region43: #{tpu_custom_call.1} parent=11 // pred_region
          _
        $region44: #{tpu_custom_call.1} parent=11 // pred_fallthru
          _
        // Predicated region
        $region45: #{tpu_custom_call.1} parent=11 // pred_check
          %p334 = pneg %p239
        $region46: #{tpu_custom_call.1} parent=11 // pred_check_branch
          %336 = sbr.rel (%p334) target = $region48
        $region47: #{tpu_custom_call.1} parent=11 // pred_region
          _
        $region48: #{tpu_custom_call.1} parent=11 // pred_fallthru
          _
      $region12: #{tpu_custom_call.1} parent=5 // pred_fallthru
        _
      %p337 = scmp.lt.s32.totalorder %s24, 2
      // Predicated region
      $region49: #{tpu_custom_call.1} parent=5 // pred_check
        %p338 = pneg %p337
      $region50: #{tpu_custom_call.1} parent=5 // pred_check_branch
        %340 = sbr.rel (%p338) target = $region52
      $region51: #{tpu_custom_call.1} parent=5 // pred_region
        // Predicated region
        $region53: #{tpu_custom_call.1} parent=51 // pred_check
          %p341 = pneg %p44
        $region54: #{tpu_custom_call.1} parent=51 // pred_check_branch
          %343 = sbr.rel (%p341) target = $region56
        $region55: #{tpu_custom_call.1} parent=51 // pred_region
          %s344 = sand.u32 %s34, 1
          %s345 = scalar_lea.sflag [#allocation3], %s344
          %s346 = sand.u32 %s34, 1
          %s347 = smul.addr %s346, 64
          %s348 = scalar_lea.vmem [#allocation2], %s347
          %s350 = ssub.s32 1024, 1024
          %351 = vsyncadd %s345, %s350
          %s352 = smul.addr %s24, 8
          %s353 = smul.addr %s352, 128
          %s354 = scalar_lea.hbm %s0, %s353
          %s355 = sshll.u32 %s348, 4
          %s356 = int_to_ptr.vmem [resolvable:$true] %s355
          %361 = dma.hbm_to_vmem [thread:$0]  %s354, 1024, %s356, %s345, 512, 512, 32
        $region56: #{tpu_custom_call.1} parent=51 // pred_fallthru
          _
      $region52: #{tpu_custom_call.1} parent=5 // pred_fallthru
        _
      %p362 = scmp.le.s32.totalorder 1, %s24
      %p363 = scmp.lt.s32.totalorder %s24, 3
      %p364 = pnand %p362, %p363
      %p365 = pneg %p364
      // Predicated region
      $region57: #{tpu_custom_call.1} parent=5 // pred_check
        _
      $region58: #{tpu_custom_call.1} parent=5 // pred_check_branch
        %367 = sbr.rel (%p364) target = $region60
      $region59: #{tpu_custom_call.1} parent=5 // pred_region
        %s368 = ssub.s32 %s24, 1
        %s369 = sand.u32 %s37, 1
        %s370 = scalar_lea.sflag [#allocation3], %s369
        %s371 = sand.u32 %s37, 1
        %s372 = smul.addr %s371, 64
        %s373 = scalar_lea.vmem [#allocation2], %s372
        // Predicated region
        $region61: #{tpu_custom_call.1} parent=59 // pred_check
          %p374 = pneg %p50
        $region62: #{tpu_custom_call.1} parent=59 // pred_check_branch
          %376 = sbr.rel (%p374) target = $region64
        $region63: #{tpu_custom_call.1} parent=59 // pred_region
          %377 = dma.done %s370, 1024
        $region64: #{tpu_custom_call.1} parent=59 // pred_fallthru
          _
        // Predicated region
        $region65: #{tpu_custom_call.1} parent=59 // pred_check
          %p378 = pneg %p71
        $region66: #{tpu_custom_call.1} parent=59 // pred_check_branch
          %380 = sbr.rel (%p378) target = $region68
        $region67: #{tpu_custom_call.1} parent=59 // pred_region
          %381 = dma.done [#allocation6], 8192
        $region68: #{tpu_custom_call.1} parent=59 // pred_fallthru
          _
        // Predicated region
        $region69: #{tpu_custom_call.1} parent=59 // pred_check
          %p382 = pneg %p134
        $region70: #{tpu_custom_call.1} parent=59 // pred_check_branch
          %384 = sbr.rel (%p382) target = $region72
        $region71: #{tpu_custom_call.1} parent=59 // pred_region
          %385 = dma.done [#allocation6], 6144
        $region72: #{tpu_custom_call.1} parent=59 // pred_fallthru
          _
        // Predicated region
        $region73: #{tpu_custom_call.1} parent=59 // pred_check
          %p386 = pneg %p197
        $region74: #{tpu_custom_call.1} parent=59 // pred_check_branch
          %388 = sbr.rel (%p386) target = $region76
        $region75: #{tpu_custom_call.1} parent=59 // pred_region
          %389 = dma.done [#allocation9], 8192
        $region76: #{tpu_custom_call.1} parent=59 // pred_fallthru
          _
        %s390 = sand.u32 %s37, 1
        %s391 = scalar_lea.sflag [#allocation3], %s390
        %s392 = sand.u32 %s37, 1
        %s393 = smul.addr %s392, 64
        %s394 = scalar_lea.vmem [#allocation2], %s393
        %p395 = pneg %p50
        %p396 = pneg %p47
        %p397 = pneg %p71
        %p398 = pneg %p68
        %p399 = pneg %p92
        %p400 = pneg %p89
        %p401 = pneg %p113
        %p402 = pneg %p110
        %p403 = pneg %p134
        %p404 = pneg %p131
        %p405 = pneg %p155
        %p406 = pneg %p152
        %p407 = pneg %p176
        %p408 = pneg %p173
        %p409 = pneg %p197
        %p410 = pneg %p194
        %p411 = pneg %p218
        %p412 = pneg %p215
        %p413 = pneg %p239
        %p414 = pneg %p236
        %p415 = pneg %p265
        %p416 = pneg %p262
        %s417 = sand.u32 %s252, 1
        %s418 = scalar_lea.sflag [#allocation4], %s417
        %s419 = sand.u32 %s252, 1
        %s420 = smul.addr %s419, 64
        %s421 = scalar_lea.vmem [#allocation10], %s420
        %v422 = vld [vmem:[%s373] sm:$0xff]
        %v423 = vld [vmem:[%s373 + $0x8] sm:$0xff]
        %v424 = vld [vmem:[%s373 + $0x10] sm:$0xff]
        %v425 = vld [vmem:[%s373 + $0x18] sm:$0xff]
        %v426 = vld [vmem:[%s373 + $0x20] sm:$0xff]
        %v427 = vld [vmem:[%s373 + $0x28] sm:$0xff]
        %v428 = vld [vmem:[%s373 + $0x30] sm:$0xff]
        %v429 = vld [vmem:[%s373 + $0x38] sm:$0xff]
        %v430 = vld [vmem:[#allocation5] sm:$0xff]
        %v431 = vld [vmem:[#allocation5 + $0x8] sm:$0xff]
        %v432 = vld [vmem:[#allocation5 + $0x10] sm:$0xff]
        %v433 = vld [vmem:[#allocation5 + $0x18] sm:$0xff]
        %v434 = vld [vmem:[#allocation5 + $0x20] sm:$0xff]
        %v435 = vld [vmem:[#allocation5 + $0x28] sm:$0xff]
        %v436 = vld [vmem:[#allocation5 + $0x30] sm:$0xff]
        %v437 = vld [vmem:[#allocation5 + $0x38] sm:$0xff]
        %v438 = vld [vmem:[#allocation5 + $0x40] sm:$0xff]
        %v439 = vld [vmem:[#allocation5 + $0x48] sm:$0xff]
        %v440 = vld [vmem:[#allocation5 + $0x50] sm:$0xff]
        %v441 = vld [vmem:[#allocation5 + $0x58] sm:$0xff]
        %v442 = vld [vmem:[#allocation5 + $0x60] sm:$0xff]
        %v443 = vld [vmem:[#allocation5 + $0x68] sm:$0xff]
        %v444 = vld [vmem:[#allocation5 + $0x70] sm:$0xff]
        %v445 = vld [vmem:[#allocation5 + $0x78] sm:$0xff]
        %v446 = vld [vmem:[#allocation5 + $0x80] sm:$0xff]
        %v447 = vld [vmem:[#allocation5 + $0x88] sm:$0xff]
        %v448 = vld [vmem:[#allocation5 + $0x90] sm:$0xff]
        %v449 = vld [vmem:[#allocation5 + $0x98] sm:$0xff]
        %v450 = vld [vmem:[#allocation5 + $0xa0] sm:$0xff]
        %v451 = vld [vmem:[#allocation5 + $0xa8] sm:$0xff]
        %v452 = vld [vmem:[#allocation5 + $0xb0] sm:$0xff]
        %v453 = vld [vmem:[#allocation5 + $0xb8] sm:$0xff]
        %v454 = vld [vmem:[#allocation5 + $0xc0] sm:$0xff]
        %v455 = vld [vmem:[#allocation5 + $0xc8] sm:$0xff]
        %v456 = vld [vmem:[#allocation5 + $0xd0] sm:$0xff]
        %v457 = vld [vmem:[#allocation5 + $0xd8] sm:$0xff]
        %v458 = vld [vmem:[#allocation5 + $0xe0] sm:$0xff]
        %v459 = vld [vmem:[#allocation5 + $0xe8] sm:$0xff]
        %v460 = vld [vmem:[#allocation5 + $0xf0] sm:$0xff]
        %v461 = vld [vmem:[#allocation5 + $0xf8] sm:$0xff]
        %v462 = vld [vmem:[#allocation5 + $0x100] sm:$0xff]
        %v463 = vld [vmem:[#allocation5 + $0x108] sm:$0xff]
        %v464 = vld [vmem:[#allocation5 + $0x110] sm:$0xff]
        %v465 = vld [vmem:[#allocation5 + $0x118] sm:$0xff]
        %v466 = vld [vmem:[#allocation5 + $0x120] sm:$0xff]
        %v467 = vld [vmem:[#allocation5 + $0x128] sm:$0xff]
        %v468 = vld [vmem:[#allocation5 + $0x130] sm:$0xff]
        %v469 = vld [vmem:[#allocation5 + $0x138] sm:$0xff]
        %v470 = vld [vmem:[#allocation5 + $0x140] sm:$0xff]
        %v471 = vld [vmem:[#allocation5 + $0x148] sm:$0xff]
        %v472 = vld [vmem:[#allocation5 + $0x150] sm:$0xff]
        %v473 = vld [vmem:[#allocation5 + $0x158] sm:$0xff]
        %v474 = vld [vmem:[#allocation5 + $0x160] sm:$0xff]
        %v475 = vld [vmem:[#allocation5 + $0x168] sm:$0xff]
        %v476 = vld [vmem:[#allocation5 + $0x170] sm:$0xff]
        %v477 = vld [vmem:[#allocation5 + $0x178] sm:$0xff]
        %v478 = vld [vmem:[#allocation5 + $0x180] sm:$0xff]
        %v479 = vld [vmem:[#allocation5 + $0x188] sm:$0xff]
        %v480 = vld [vmem:[#allocation5 + $0x190] sm:$0xff]
        %v481 = vld [vmem:[#allocation5 + $0x198] sm:$0xff]
        %v482 = vld [vmem:[#allocation5 + $0x1a0] sm:$0xff]
        %v483 = vld [vmem:[#allocation5 + $0x1a8] sm:$0xff]
        %v484 = vld [vmem:[#allocation5 + $0x1b0] sm:$0xff]
        %v485 = vld [vmem:[#allocation5 + $0x1b8] sm:$0xff]
        %v486 = vld [vmem:[#allocation5 + $0x1c0] sm:$0xff]
        %v487 = vld [vmem:[#allocation5 + $0x1c8] sm:$0xff]
        %v488 = vld [vmem:[#allocation5 + $0x1d0] sm:$0xff]
        %v489 = vld [vmem:[#allocation5 + $0x1d8] sm:$0xff]
        %v490 = vld [vmem:[#allocation5 + $0x1e0] sm:$0xff]
        %v491 = vld [vmem:[#allocation5 + $0x1e8] sm:$0xff]
        %v492 = vld [vmem:[#allocation5 + $0x1f0] sm:$0xff]
        %v493 = vld [vmem:[#allocation5 + $0x1f8] sm:$0xff]
        %494 = vmatprep.subr.mxu0 0.0
        %495 = vmatpush1.msra.mxu0 %v430
        %496 = vmatprep.subr.mxu0 0.0
        %497 = vmatpush1.msra.mxu0 %v431
        %498 = vmatprep.subr.mxu0 0.0
        %499 = vmatpush1.msra.mxu0 %v432
        %500 = vmatprep.subr.mxu0 0.0
        %501 = vmatpush1.msra.mxu0 %v433
        %502 = vmatprep.subr.mxu0 0.0
        %503 = vmatpush1.msra.mxu0 %v434
        %504 = vmatprep.subr.mxu0 0.0
        %505 = vmatpush1.msra.mxu0 %v435
        %506 = vmatprep.subr.mxu0 0.0
        %507 = vmatpush1.msra.mxu0 %v436
        %508 = vmatprep.subr.mxu0 0.0
        %509 = vmatpush1.msra.mxu0 %v437
        %510 = vmatprep.subr.mxu0 0.0
        %511 = vmatpush1.msra.mxu0 %v438
        %512 = vmatprep.subr.mxu0 0.0
        %513 = vmatpush1.msra.mxu0 %v439
        %514 = vmatprep.subr.mxu0 0.0
        %515 = vmatpush1.msra.mxu0 %v440
        %516 = vmatprep.subr.mxu0 0.0
        %517 = vmatpush1.msra.mxu0 %v441
        %518 = vmatprep.subr.mxu0 0.0
        %519 = vmatpush1.msra.mxu0 %v442
        %520 = vmatprep.subr.mxu0 0.0
        %521 = vmatpush1.msra.mxu0 %v443
        %522 = vmatprep.subr.mxu0 0.0
        %523 = vmatpush1.msra.mxu0 %v444
        %524 = vmatprep.subr.mxu0 0.0
        %525 = vmatpush1.msra.mxu0 %v445
        %526 = vmatprep.subr.mxu0 0.0
        %527 = vmatpush1.msra.mxu0 %v446
        %528 = vmatprep.subr.mxu0 0.0
        %529 = vmatpush1.msra.mxu0 %v447
        %530 = vmatprep.subr.mxu0 0.0
        %531 = vmatpush1.msra.mxu0 %v448
        %532 = vmatprep.subr.mxu0 0.0
        %533 = vmatpush1.msra.mxu0 %v449
        %534 = vmatprep.subr.mxu0 0.0
        %535 = vmatpush1.msra.mxu0 %v450
        %536 = vmatprep.subr.mxu0 0.0
        %537 = vmatpush1.msra.mxu0 %v451
        %538 = vmatprep.subr.mxu0 0.0
        %539 = vmatpush1.msra.mxu0 %v452
        %540 = vmatprep.subr.mxu0 0.0
        %541 = vmatpush1.msra.mxu0 %v453
        %542 = vmatprep.subr.mxu0 0.0
        %543 = vmatpush1.msra.mxu0 %v454
        %544 = vmatprep.subr.mxu0 0.0
        %545 = vmatpush1.msra.mxu0 %v455
        %546 = vmatprep.subr.mxu0 0.0
        %547 = vmatpush1.msra.mxu0 %v456
        %548 = vmatprep.subr.mxu0 0.0
        %549 = vmatpush1.msra.mxu0 %v457
        %550 = vmatprep.subr.mxu0 0.0
        %551 = vmatpush1.msra.mxu0 %v458
        %552 = vmatprep.subr.mxu0 0.0
        %553 = vmatpush1.msra.mxu0 %v459
        %554 = vmatprep.subr.mxu0 0.0
        %555 = vmatpush1.msra.mxu0 %v460
        %556 = vmatprep.subr.mxu0 0.0
        %557 = vmatpush1.msra.mxu0 %v461
        %558 = vmatprep.mubr.f32.mxu0 %v423
        %559 = vmatmul.mubr.f32.gmra.mrb[0].mxu0 %v422
        %v560 = vpop.f32.mrb[0].mxu0
        %v561 = vadd.f32 0.0, %v560
        %v562 = vpop.f32.mrb[0].mxu0
        %563 = vmatprep.mubr.f32.mxu0 %v427
        %564 = vmatmul.mubr.f32.gmra.mrb[0].mxu0 %v426
        %v565 = vpop.f32.mrb[0].mxu0
        %v566 = vadd.f32 0.0, %v565
        %v567 = vpop.f32.mrb[0].mxu0
        %568 = vdwg.mxu0
        %569 = vmatprep.subr.mxu0 0.0
        %570 = vmatpush1.msra.mxu0 %v462
        %571 = vmatprep.subr.mxu0 0.0
        %572 = vmatpush1.msra.mxu0 %v463
        %573 = vmatprep.subr.mxu0 0.0
        %574 = vmatpush1.msra.mxu0 %v464
        %575 = vmatprep.subr.mxu0 0.0
        %576 = vmatpush1.msra.mxu0 %v465
        %577 = vmatprep.subr.mxu0 0.0
        %578 = vmatpush1.msra.mxu0 %v466
        %579 = vmatprep.subr.mxu0 0.0
        %580 = vmatpush1.msra.mxu0 %v467
        %581 = vmatprep.subr.mxu0 0.0
        %582 = vmatpush1.msra.mxu0 %v468
        %583 = vmatprep.subr.mxu0 0.0
        %584 = vmatpush1.msra.mxu0 %v469
        %585 = vmatprep.subr.mxu0 0.0
        %586 = vmatpush1.msra.mxu0 %v470
        %587 = vmatprep.subr.mxu0 0.0
        %588 = vmatpush1.msra.mxu0 %v471
        %589 = vmatprep.subr.mxu0 0.0
        %590 = vmatpush1.msra.mxu0 %v472
        %591 = vmatprep.subr.mxu0 0.0
        %592 = vmatpush1.msra.mxu0 %v473
        %593 = vmatprep.subr.mxu0 0.0
        %594 = vmatpush1.msra.mxu0 %v474
        %595 = vmatprep.subr.mxu0 0.0
        %596 = vmatpush1.msra.mxu0 %v475
        %597 = vmatprep.subr.mxu0 0.0
        %598 = vmatpush1.msra.mxu0 %v476
        %599 = vmatprep.subr.mxu0 0.0
        %600 = vmatpush1.msra.mxu0 %v477
        %601 = vmatprep.subr.mxu0 0.0
        %602 = vmatpush1.msra.mxu0 %v478
        %603 = vmatprep.subr.mxu0 0.0
        %604 = vmatpush1.msra.mxu0 %v479
        %605 = vmatprep.subr.mxu0 0.0
        %606 = vmatpush1.msra.mxu0 %v480
        %607 = vmatprep.subr.mxu0 0.0
        %608 = vmatpush1.msra.mxu0 %v481
        %609 = vmatprep.subr.mxu0 0.0
        %610 = vmatpush1.msra.mxu0 %v482
        %611 = vmatprep.subr.mxu0 0.0
        %612 = vmatpush1.msra.mxu0 %v483
        %613 = vmatprep.subr.mxu0 0.0
        %614 = vmatpush1.msra.mxu0 %v484
        %615 = vmatprep.subr.mxu0 0.0
        %616 = vmatpush1.msra.mxu0 %v485
        %617 = vmatprep.subr.mxu0 0.0
        %618 = vmatpush1.msra.mxu0 %v486
        %619 = vmatprep.subr.mxu0 0.0
        %620 = vmatpush1.msra.mxu0 %v487
        %621 = vmatprep.subr.mxu0 0.0
        %622 = vmatpush1.msra.mxu0 %v488
        %623 = vmatprep.subr.mxu0 0.0
        %624 = vmatpush1.msra.mxu0 %v489
        %625 = vmatprep.subr.mxu0 0.0
        %626 = vmatpush1.msra.mxu0 %v490
        %627 = vmatprep.subr.mxu0 0.0
        %628 = vmatpush1.msra.mxu0 %v491
        %629 = vmatprep.subr.mxu0 0.0
        %630 = vmatpush1.msra.mxu0 %v492
        %631 = vmatprep.subr.mxu0 0.0
        %632 = vmatpush1.msra.mxu0 %v493
        %633 = vmatprep.mubr.f32.mxu0 %v425
        %634 = vmatmul.mubr.f32.gmra.mrb[0].mxu0 %v424
        %v635 = vpop.f32.mrb[0].mxu0
        %v636 = vadd.f32 %v561, %v635
        %v637 = vpop.f32.mrb[0].mxu0
        %638 = vmatprep.mubr.f32.mxu0 %v429
        %639 = vmatmul.mubr.f32.gmra.mrb[0].mxu0 %v428
        %v640 = vpop.f32.mrb[0].mxu0
        %v641 = vadd.f32 %v566, %v640
        %v642 = vpop.f32.mrb[0].mxu0
        %643 = vdwg.mxu0
        %v644 = vld [vmem:[%s2] sm:$0x1]
        %v646 = vlaneseq
        %v647 = vshrl.u32 %v646, 7
        %v648 = vsub.s32 0, %v647
        %v649 = vrot.slane %v644, %v648
        %v651 = vmul.f32 %v636, %v649
        %v652 = vmul.f32 %v641, %v649
        %v653 = vld [vmem:[%s3] sm:$0x1]
        %v655 = vlaneseq
        %v656 = vshrl.u32 %v655, 7
        %v657 = vsub.s32 0, %v656
        %v658 = vrot.slane %v653, %v657
        %v660 = vadd.f32 %v651, %v658
        %v661 = vadd.f32 %v652, %v658
        %v662 = vmax.f32 %v660, 0.0
        %v663 = vmax.f32 %v661, 0.0
        %vm666 = vcmask 1040384
        %v667 = vrot.slane %v662, 7
        %v668 = vrot.slane %v663, 7
        %v669 = vsel %vm666, %v667, %v668
        %v673 = vsel %vm666, 0.0, %v667
        %v674 = vsel %vm666, %v668, 0.0
        %vm677 = vcmask 1046528
        %v678 = vrot.slane %v673, 1
        %v679 = vrot.slane %v669, 1
        %v680 = vsel %vm677, %v678, %v679
        %v681 = vrot.slane %v674, 1
        %v682 = vsel %vm677, %v679, %v681
        %vm685 = vcmask 1045504
        %v686 = vrot.slane %v673, 2
        %v687 = vrot.slane %v669, 2
        %v688 = vsel %vm685, %v686, %v687
        %v689 = vrot.slane %v674, 2
        %v690 = vsel %vm685, %v687, %v689
        %v693 = vld [vmem:[#allocation7] sm:$0xff]
        %v694 = vld [vmem:[#allocation7 + $0x8] sm:$0xff]
        %v695 = vld [vmem:[#allocation7 + $0x10] sm:$0xff]
        %v696 = vld [vmem:[#allocation7 + $0x18] sm:$0xff]
        %v697 = vld [vmem:[#allocation7 + $0x20] sm:$0xff]
        %v698 = vld [vmem:[#allocation7 + $0x28] sm:$0xff]
        %v699 = vld [vmem:[#allocation7 + $0x30] sm:$0xff]
        %v700 = vld [vmem:[#allocation7 + $0x38] sm:$0xff]
        %v701 = vld [vmem:[#allocation7 + $0x40] sm:$0xff]
        %v702 = vld [vmem:[#allocation7 + $0x48] sm:$0xff]
        %v703 = vld [vmem:[#allocation7 + $0x50] sm:$0xff]
        %v704 = vld [vmem:[#allocation7 + $0x58] sm:$0xff]
        %v705 = vld [vmem:[#allocation7 + $0x60] sm:$0xff]
        %v706 = vld [vmem:[#allocation7 + $0x68] sm:$0xff]
        %v707 = vld [vmem:[#allocation7 + $0x70] sm:$0xff]
        %v708 = vld [vmem:[#allocation7 + $0x78] sm:$0xff]
        %v709 = vld [vmem:[#allocation7 + $0x80] sm:$0xff]
        %v710 = vld [vmem:[#allocation7 + $0x88] sm:$0xff]
        %v711 = vld [vmem:[#allocation7 + $0x90] sm:$0xff]
        %v712 = vld [vmem:[#allocation7 + $0x98] sm:$0xff]
        %v713 = vld [vmem:[#allocation7 + $0xa0] sm:$0xff]
        %v714 = vld [vmem:[#allocation7 + $0xa8] sm:$0xff]
        %v715 = vld [vmem:[#allocation7 + $0xb0] sm:$0xff]
        %v716 = vld [vmem:[#allocation7 + $0xb8] sm:$0xff]
        %v717 = vld [vmem:[#allocation7 + $0xc0] sm:$0xff]
        %v718 = vld [vmem:[#allocation7 + $0xc8] sm:$0xff]
        %v719 = vld [vmem:[#allocation7 + $0xd0] sm:$0xff]
        %v720 = vld [vmem:[#allocation7 + $0xd8] sm:$0xff]
        %v721 = vld [vmem:[#allocation7 + $0xe0] sm:$0xff]
        %v722 = vld [vmem:[#allocation7 + $0xe8] sm:$0xff]
        %v723 = vld [vmem:[#allocation7 + $0xf0] sm:$0xff]
        %v724 = vld [vmem:[#allocation7 + $0xf8] sm:$0xff]
        %v725 = vld [vmem:[#allocation7 + $0x100] sm:$0xff]
        %v726 = vld [vmem:[#allocation7 + $0x108] sm:$0xff]
        %v727 = vld [vmem:[#allocation7 + $0x110] sm:$0xff]
        %v728 = vld [vmem:[#allocation7 + $0x118] sm:$0xff]
        %v729 = vld [vmem:[#allocation7 + $0x120] sm:$0xff]
        %v730 = vld [vmem:[#allocation7 + $0x128] sm:$0xff]
        %v731 = vld [vmem:[#allocation7 + $0x130] sm:$0xff]
        %v732 = vld [vmem:[#allocation7 + $0x138] sm:$0xff]
        %v733 = vld [vmem:[#allocation7 + $0x140] sm:$0xff]
        %v734 = vld [vmem:[#allocation7 + $0x148] sm:$0xff]
        %v735 = vld [vmem:[#allocation7 + $0x150] sm:$0xff]
        %v736 = vld [vmem:[#allocation7 + $0x158] sm:$0xff]
        %v737 = vld [vmem:[#allocation7 + $0x160] sm:$0xff]
        %v738 = vld [vmem:[#allocation7 + $0x168] sm:$0xff]
        %v739 = vld [vmem:[#allocation7 + $0x170] sm:$0xff]
        %v740 = vld [vmem:[#allocation7 + $0x178] sm:$0xff]
        %741 = vmatprep.subr.mxu0 0.0
        %742 = vmatpush1.msra.mxu0 %v693
        %743 = vmatprep.subr.mxu0 0.0
        %744 = vmatpush1.msra.mxu0 %v694
        %745 = vmatprep.subr.mxu0 0.0
        %746 = vmatpush1.msra.mxu0 %v695
        %747 = vmatprep.subr.mxu0 0.0
        %748 = vmatpush1.msra.mxu0 %v696
        %749 = vmatprep.subr.mxu0 0.0
        %750 = vmatpush1.msra.mxu0 %v697
        %751 = vmatprep.subr.mxu0 0.0
        %752 = vmatpush1.msra.mxu0 %v698
        %753 = vmatprep.subr.mxu0 0.0
        %754 = vmatpush1.msra.mxu0 %v699
        %755 = vmatprep.subr.mxu0 0.0
        %756 = vmatpush1.msra.mxu0 %v700
        %757 = vmatprep.subr.mxu0 0.0
        %758 = vmatpush1.msra.mxu0 %v701
        %759 = vmatprep.subr.mxu0 0.0
        %760 = vmatpush1.msra.mxu0 %v702
        %761 = vmatprep.subr.mxu0 0.0
        %762 = vmatpush1.msra.mxu0 %v703
        %763 = vmatprep.subr.mxu0 0.0
        %764 = vmatpush1.msra.mxu0 %v704
        %765 = vmatprep.subr.mxu0 0.0
        %766 = vmatpush1.msra.mxu0 %v705
        %767 = vmatprep.subr.mxu0 0.0
        %768 = vmatpush1.msra.mxu0 %v706
        %769 = vmatprep.subr.mxu0 0.0
        %770 = vmatpush1.msra.mxu0 %v707
        %771 = vmatprep.subr.mxu0 0.0
        %772 = vmatpush1.msra.mxu0 %v708
        %773 = vmatprep.subr.mxu0 0.0
        %774 = vmatpush1.msra.mxu0 %v709
        %775 = vmatprep.subr.mxu0 0.0
        %776 = vmatpush1.msra.mxu0 %v710
        %777 = vmatprep.subr.mxu0 0.0
        %778 = vmatpush1.msra.mxu0 %v711
        %779 = vmatprep.subr.mxu0 0.0
        %780 = vmatpush1.msra.mxu0 %v712
        %781 = vmatprep.subr.mxu0 0.0
        %782 = vmatpush1.msra.mxu0 %v713
        %783 = vmatprep.subr.mxu0 0.0
        %784 = vmatpush1.msra.mxu0 %v714
        %785 = vmatprep.subr.mxu0 0.0
        %786 = vmatpush1.msra.mxu0 %v715
        %787 = vmatprep.subr.mxu0 0.0
        %788 = vmatpush1.msra.mxu0 %v716
        %789 = vmatprep.subr.mxu0 0.0
        %790 = vmatpush1.msra.mxu0 %v717
        %791 = vmatprep.subr.mxu0 0.0
        %792 = vmatpush1.msra.mxu0 %v718
        %793 = vmatprep.subr.mxu0 0.0
        %794 = vmatpush1.msra.mxu0 %v719
        %795 = vmatprep.subr.mxu0 0.0
        %796 = vmatpush1.msra.mxu0 %v720
        %797 = vmatprep.subr.mxu0 0.0
        %798 = vmatpush1.msra.mxu0 %v721
        %799 = vmatprep.subr.mxu0 0.0
        %800 = vmatpush1.msra.mxu0 %v722
        %801 = vmatprep.subr.mxu0 0.0
        %802 = vmatpush1.msra.mxu0 %v723
        %803 = vmatprep.subr.mxu0 0.0
        %804 = vmatpush1.msra.mxu0 %v724
        %805 = vmatprep.mubr.f32.mxu0 %v680
        %806 = vmatmul.mubr.f32.gmra.mrb[0].mxu0 %v673
        %v807 = vpop.f32.mrb[0].mxu0
        %v808 = vadd.f32 0.0, %v807
        %v809 = vpop.f32.mrb[0].mxu0
        %810 = vmatprep.mubr.f32.mxu0 %v682
        %811 = vmatmul.mubr.f32.gmra.mrb[0].mxu0 %v669
        %v812 = vpop.f32.mrb[0].mxu0
        %v813 = vadd.f32 0.0, %v812
        %v814 = vpop.f32.mrb[0].mxu0
        %815 = vdwg.mxu0
        %816 = vmatprep.subr.mxu0 0.0
        %817 = vmatpush1.msra.mxu0 %v725
        %818 = vmatprep.subr.mxu0 0.0
        %819 = vmatpush1.msra.mxu0 %v726
        %820 = vmatprep.subr.mxu0 0.0
        %821 = vmatpush1.msra.mxu0 %v727
        %822 = vmatprep.subr.mxu0 0.0
        %823 = vmatpush1.msra.mxu0 %v728
        %824 = vmatprep.subr.mxu0 0.0
        %825 = vmatpush1.msra.mxu0 %v729
        %826 = vmatprep.subr.mxu0 0.0
        %827 = vmatpush1.msra.mxu0 %v730
        %828 = vmatprep.subr.mxu0 0.0
        %829 = vmatpush1.msra.mxu0 %v731
        %830 = vmatprep.subr.mxu0 0.0
        %831 = vmatpush1.msra.mxu0 %v732
        %832 = vmatprep.subr.mxu0 0.0
        %833 = vmatpush1.msra.mxu0 %v733
        %834 = vmatprep.subr.mxu0 0.0
        %835 = vmatpush1.msra.mxu0 %v734
        %836 = vmatprep.subr.mxu0 0.0
        %837 = vmatpush1.msra.mxu0 %v735
        %838 = vmatprep.subr.mxu0 0.0
        %839 = vmatpush1.msra.mxu0 %v736
        %840 = vmatprep.subr.mxu0 0.0
        %841 = vmatpush1.msra.mxu0 %v737
        %842 = vmatprep.subr.mxu0 0.0
        %843 = vmatpush1.msra.mxu0 %v738
        %844 = vmatprep.subr.mxu0 0.0
        %845 = vmatpush1.msra.mxu0 %v739
        %846 = vmatprep.subr.mxu0 0.0
        %847 = vmatpush1.msra.mxu0 %v740
        %848 = vmatprep.subr.mxu0 0.0
        %849 = vmatpush1.msra.mxu0 0.0
        %850 = vmatprep.subr.mxu0 0.0
        %851 = vmatpush1.msra.mxu0 0.0
        %852 = vmatprep.subr.mxu0 0.0
        %853 = vmatpush1.msra.mxu0 0.0
        %854 = vmatprep.subr.mxu0 0.0
        %855 = vmatpush1.msra.mxu0 0.0
        %856 = vmatprep.subr.mxu0 0.0
        %857 = vmatpush1.msra.mxu0 0.0
        %858 = vmatprep.subr.mxu0 0.0
        %859 = vmatpush1.msra.mxu0 0.0
        %860 = vmatprep.subr.mxu0 0.0
        %861 = vmatpush1.msra.mxu0 0.0
        %862 = vmatprep.subr.mxu0 0.0
        %863 = vmatpush1.msra.mxu0 0.0
        %864 = vmatprep.subr.mxu0 0.0
        %865 = vmatpush1.msra.mxu0 0.0
        %866 = vmatprep.subr.mxu0 0.0
        %867 = vmatpush1.msra.mxu0 0.0
        %868 = vmatprep.subr.mxu0 0.0
        %869 = vmatpush1.msra.mxu0 0.0
        %870 = vmatprep.subr.mxu0 0.0
        %871 = vmatpush1.msra.mxu0 0.0
        %872 = vmatprep.subr.mxu0 0.0
        %873 = vmatpush1.msra.mxu0 0.0
        %874 = vmatprep.subr.mxu0 0.0
        %875 = vmatpush1.msra.mxu0 0.0
        %876 = vmatprep.subr.mxu0 0.0
        %877 = vmatpush1.msra.mxu0 0.0
        %878 = vmatprep.subr.mxu0 0.0
        %879 = vmatpush1.msra.mxu0 0.0
        %880 = vmatprep.mubr.f32.mxu0 0.0
        %881 = vmatmul.mubr.f32.gmra.mrb[0].mxu0 %v688
        %v882 = vpop.f32.mrb[0].mxu0
        %v883 = vadd.f32 %v808, %v882
        %v884 = vpop.f32.mrb[0].mxu0
        %885 = vmatprep.mubr.f32.mxu0 0.0
        %886 = vmatmul.mubr.f32.gmra.mrb[0].mxu0 %v690
        %v887 = vpop.f32.mrb[0].mxu0
        %v888 = vadd.f32 %v813, %v887
        %v889 = vpop.f32.mrb[0].mxu0
        %890 = vdwg.mxu0
        %v891 = vld [vmem:[%s5] sm:$0x1]
        %v893 = vlaneseq
        %v894 = vshrl.u32 %v893, 7
        %v895 = vsub.s32 0, %v894
        %v896 = vrot.slane %v891, %v895
        %v898 = vmul.f32 %v883, %v896
        %v899 = vmul.f32 %v888, %v896
        %v900 = vld [vmem:[%s6] sm:$0x1]
        %v902 = vlaneseq
        %v903 = vshrl.u32 %v902, 7
        %v904 = vsub.s32 0, %v903
        %v905 = vrot.slane %v900, %v904
        %v907 = vadd.f32 %v898, %v905
        %v908 = vadd.f32 %v899, %v905
        %v909 = vmax.f32 %v907, 0.0
        %v910 = vmax.f32 %v908, 0.0
        %v911 = vld [vmem:[#allocation8] sm:$0xff]
        %v912 = vld [vmem:[#allocation8 + $0x8] sm:$0xff]
        %v913 = vld [vmem:[#allocation8 + $0x10] sm:$0xff]
        %v914 = vld [vmem:[#allocation8 + $0x18] sm:$0xff]
        %v915 = vld [vmem:[#allocation8 + $0x20] sm:$0xff]
        %v916 = vld [vmem:[#allocation8 + $0x28] sm:$0xff]
        %v917 = vld [vmem:[#allocation8 + $0x30] sm:$0xff]
        %v918 = vld [vmem:[#allocation8 + $0x38] sm:$0xff]
        %v919 = vld [vmem:[#allocation8 + $0x40] sm:$0xff]
        %v920 = vld [vmem:[#allocation8 + $0x48] sm:$0xff]
        %v921 = vld [vmem:[#allocation8 + $0x50] sm:$0xff]
        %v922 = vld [vmem:[#allocation8 + $0x58] sm:$0xff]
        %v923 = vld [vmem:[#allocation8 + $0x60] sm:$0xff]
        %v924 = vld [vmem:[#allocation8 + $0x68] sm:$0xff]
        %v925 = vld [vmem:[#allocation8 + $0x70] sm:$0xff]
        %v926 = vld [vmem:[#allocation8 + $0x78] sm:$0xff]
        %v927 = vld [vmem:[#allocation8 + $0x80] sm:$0xff]
        %v928 = vld [vmem:[#allocation8 + $0x88] sm:$0xff]
        %v929 = vld [vmem:[#allocation8 + $0x90] sm:$0xff]
        %v930 = vld [vmem:[#allocation8 + $0x98] sm:$0xff]
        %v931 = vld [vmem:[#allocation8 + $0xa0] sm:$0xff]
        %v932 = vld [vmem:[#allocation8 + $0xa8] sm:$0xff]
        %v933 = vld [vmem:[#allocation8 + $0xb0] sm:$0xff]
        %v934 = vld [vmem:[#allocation8 + $0xb8] sm:$0xff]
        %v935 = vld [vmem:[#allocation8 + $0xc0] sm:$0xff]
        %v936 = vld [vmem:[#allocation8 + $0xc8] sm:$0xff]
        %v937 = vld [vmem:[#allocation8 + $0xd0] sm:$0xff]
        %v938 = vld [vmem:[#allocation8 + $0xd8] sm:$0xff]
        %v939 = vld [vmem:[#allocation8 + $0xe0] sm:$0xff]
        %v940 = vld [vmem:[#allocation8 + $0xe8] sm:$0xff]
        %v941 = vld [vmem:[#allocation8 + $0xf0] sm:$0xff]
        %v942 = vld [vmem:[#allocation8 + $0xf8] sm:$0xff]
        %v943 = vld [vmem:[#allocation8 + $0x100] sm:$0xff]
        %v944 = vld [vmem:[#allocation8 + $0x108] sm:$0xff]
        %v945 = vld [vmem:[#allocation8 + $0x110] sm:$0xff]
        %v946 = vld [vmem:[#allocation8 + $0x118] sm:$0xff]
        %v947 = vld [vmem:[#allocation8 + $0x120] sm:$0xff]
        %v948 = vld [vmem:[#allocation8 + $0x128] sm:$0xff]
        %v949 = vld [vmem:[#allocation8 + $0x130] sm:$0xff]
        %v950 = vld [vmem:[#allocation8 + $0x138] sm:$0xff]
        %v951 = vld [vmem:[#allocation8 + $0x140] sm:$0xff]
        %v952 = vld [vmem:[#allocation8 + $0x148] sm:$0xff]
        %v953 = vld [vmem:[#allocation8 + $0x150] sm:$0xff]
        %v954 = vld [vmem:[#allocation8 + $0x158] sm:$0xff]
        %v955 = vld [vmem:[#allocation8 + $0x160] sm:$0xff]
        %v956 = vld [vmem:[#allocation8 + $0x168] sm:$0xff]
        %v957 = vld [vmem:[#allocation8 + $0x170] sm:$0xff]
        %v958 = vld [vmem:[#allocation8 + $0x178] sm:$0xff]
        %v959 = vld [vmem:[#allocation8 + $0x180] sm:$0xff]
        %v960 = vld [vmem:[#allocation8 + $0x188] sm:$0xff]
        %v961 = vld [vmem:[#allocation8 + $0x190] sm:$0xff]
        %v962 = vld [vmem:[#allocation8 + $0x198] sm:$0xff]
        %v963 = vld [vmem:[#allocation8 + $0x1a0] sm:$0xff]
        %v964 = vld [vmem:[#allocation8 + $0x1a8] sm:$0xff]
        %v965 = vld [vmem:[#allocation8 + $0x1b0] sm:$0xff]
        %v966 = vld [vmem:[#allocation8 + $0x1b8] sm:$0xff]
        %v967 = vld [vmem:[#allocation8 + $0x1c0] sm:$0xff]
        %v968 = vld [vmem:[#allocation8 + $0x1c8] sm:$0xff]
        %v969 = vld [vmem:[#allocation8 + $0x1d0] sm:$0xff]
        %v970 = vld [vmem:[#allocation8 + $0x1d8] sm:$0xff]
        %v971 = vld [vmem:[#allocation8 + $0x1e0] sm:$0xff]
        %v972 = vld [vmem:[#allocation8 + $0x1e8] sm:$0xff]
        %v973 = vld [vmem:[#allocation8 + $0x1f0] sm:$0xff]
        %v974 = vld [vmem:[#allocation8 + $0x1f8] sm:$0xff]
        %975 = vmatprep.subr.mxu0 %v912
        %976 = vmatpush1.msra.mxu0 %v911
        %977 = vmatprep.subr.mxu0 %v916
        %978 = vmatpush1.msra.mxu0 %v915
        %979 = vmatprep.subr.mxu0 %v920
        %980 = vmatpush1.msra.mxu0 %v919
        %981 = vmatprep.subr.mxu0 %v924
        %982 = vmatpush1.msra.mxu0 %v923
        %983 = vmatprep.subr.mxu0 %v928
        %984 = vmatpush1.msra.mxu0 %v927
        %985 = vmatprep.subr.mxu0 %v932
        %986 = vmatpush1.msra.mxu0 %v931
        %987 = vmatprep.subr.mxu0 %v936
        %988 = vmatpush1.msra.mxu0 %v935
        %989 = vmatprep.subr.mxu0 %v940
        %990 = vmatpush1.msra.mxu0 %v939
        %991 = vmatprep.subr.mxu0 %v944
        %992 = vmatpush1.msra.mxu0 %v943
        %993 = vmatprep.subr.mxu0 %v948
        %994 = vmatpush1.msra.mxu0 %v947
        %995 = vmatprep.subr.mxu0 %v952
        %996 = vmatpush1.msra.mxu0 %v951
        %997 = vmatprep.subr.mxu0 %v956
        %998 = vmatpush1.msra.mxu0 %v955
        %999 = vmatprep.subr.mxu0 %v960
        %1000 = vmatpush1.msra.mxu0 %v959
        %1001 = vmatprep.subr.mxu0 %v964
        %1002 = vmatpush1.msra.mxu0 %v963
        %1003 = vmatprep.subr.mxu0 %v968
        %1004 = vmatpush1.msra.mxu0 %v967
        %1005 = vmatprep.subr.mxu0 %v972
        %1006 = vmatpush1.msra.mxu0 %v971
        %1007 = vmatprep.subr.mxu0 0.0
        %1008 = vmatpush1.msra.mxu0 0.0
        %1009 = vmatprep.subr.mxu0 0.0
        %1010 = vmatpush1.msra.mxu0 0.0
        %1011 = vmatprep.subr.mxu0 0.0
        %1012 = vmatpush1.msra.mxu0 0.0
        %1013 = vmatprep.subr.mxu0 0.0
        %1014 = vmatpush1.msra.mxu0 0.0
        %1015 = vmatprep.subr.mxu0 0.0
        %1016 = vmatpush1.msra.mxu0 0.0
        %1017 = vmatprep.subr.mxu0 0.0
        %1018 = vmatpush1.msra.mxu0 0.0
        %1019 = vmatprep.subr.mxu0 0.0
        %1020 = vmatpush1.msra.mxu0 0.0
        %1021 = vmatprep.subr.mxu0 0.0
        %1022 = vmatpush1.msra.mxu0 0.0
        %1023 = vmatprep.subr.mxu0 0.0
        %1024 = vmatpush1.msra.mxu0 0.0
        %1025 = vmatprep.subr.mxu0 0.0
        %1026 = vmatpush1.msra.mxu0 0.0
        %1027 = vmatprep.subr.mxu0 0.0
        %1028 = vmatpush1.msra.mxu0 0.0
        %1029 = vmatprep.subr.mxu0 0.0
        %1030 = vmatpush1.msra.mxu0 0.0
        %1031 = vmatprep.subr.mxu0 0.0
        %1032 = vmatpush1.msra.mxu0 0.0
        %1033 = vmatprep.subr.mxu0 0.0
        %1034 = vmatpush1.msra.mxu0 0.0
        %1035 = vmatprep.subr.mxu0 0.0
        %1036 = vmatpush1.msra.mxu0 0.0
        %1037 = vmatprep.subr.mxu0 0.0
        %1038 = vmatpush1.msra.mxu0 0.0
        %1039 = vmatprep.mubr.f32.mxu0 0.0
        %1040 = vmatmul.mubr.f32.gmra.mrb[0].mxu0 %v909
        %v1041 = vpop.f32.mrb[0].mxu0
        %v1042 = vadd.f32 0.0, %v1041
        %v1043 = vpop.f32.mrb[0].mxu0
        %v1044 = vadd.f32 0.0, %v1043
        %1045 = vmatprep.mubr.f32.mxu0 0.0
        %1046 = vmatmul.mubr.f32.gmra.mrb[0].mxu0 %v910
        %v1047 = vpop.f32.mrb[0].mxu0
        %v1048 = vadd.f32 0.0, %v1047
        %v1049 = vpop.f32.mrb[0].mxu0
        %v1050 = vadd.f32 0.0, %v1049
        %1051 = vdwg.mxu0
        %1052 = vmatprep.subr.mxu0 %v914
        %1053 = vmatpush1.msra.mxu0 %v913
        %1054 = vmatprep.subr.mxu0 %v918
        %1055 = vmatpush1.msra.mxu0 %v917
        %1056 = vmatprep.subr.mxu0 %v922
        %1057 = vmatpush1.msra.mxu0 %v921
        %1058 = vmatprep.subr.mxu0 %v926
        %1059 = vmatpush1.msra.mxu0 %v925
        %1060 = vmatprep.subr.mxu0 %v930
        %1061 = vmatpush1.msra.mxu0 %v929
        %1062 = vmatprep.subr.mxu0 %v934
        %1063 = vmatpush1.msra.mxu0 %v933
        %1064 = vmatprep.subr.mxu0 %v938
        %1065 = vmatpush1.msra.mxu0 %v937
        %1066 = vmatprep.subr.mxu0 %v942
        %1067 = vmatpush1.msra.mxu0 %v941
        %1068 = vmatprep.subr.mxu0 %v946
        %1069 = vmatpush1.msra.mxu0 %v945
        %1070 = vmatprep.subr.mxu0 %v950
        %1071 = vmatpush1.msra.mxu0 %v949
        %1072 = vmatprep.subr.mxu0 %v954
        %1073 = vmatpush1.msra.mxu0 %v953
        %1074 = vmatprep.subr.mxu0 %v958
        %1075 = vmatpush1.msra.mxu0 %v957
        %1076 = vmatprep.subr.mxu0 %v962
        %1077 = vmatpush1.msra.mxu0 %v961
        %1078 = vmatprep.subr.mxu0 %v966
        %1079 = vmatpush1.msra.mxu0 %v965
        %1080 = vmatprep.subr.mxu0 %v970
        %1081 = vmatpush1.msra.mxu0 %v969
        %1082 = vmatprep.subr.mxu0 %v974
        %1083 = vmatpush1.msra.mxu0 %v973
        %1084 = vmatprep.subr.mxu0 0.0
        %1085 = vmatpush1.msra.mxu0 0.0
        %1086 = vmatprep.subr.mxu0 0.0
        %1087 = vmatpush1.msra.mxu0 0.0
        %1088 = vmatprep.subr.mxu0 0.0
        %1089 = vmatpush1.msra.mxu0 0.0
        %1090 = vmatprep.subr.mxu0 0.0
        %1091 = vmatpush1.msra.mxu0 0.0
        %1092 = vmatprep.subr.mxu0 0.0
        %1093 = vmatpush1.msra.mxu0 0.0
        %1094 = vmatprep.subr.mxu0 0.0
        %1095 = vmatpush1.msra.mxu0 0.0
        %1096 = vmatprep.subr.mxu0 0.0
        %1097 = vmatpush1.msra.mxu0 0.0
        %1098 = vmatprep.subr.mxu0 0.0
        %1099 = vmatpush1.msra.mxu0 0.0
        %1100 = vmatprep.subr.mxu0 0.0
        %1101 = vmatpush1.msra.mxu0 0.0
        %1102 = vmatprep.subr.mxu0 0.0
        %1103 = vmatpush1.msra.mxu0 0.0
        %1104 = vmatprep.subr.mxu0 0.0
        %1105 = vmatpush1.msra.mxu0 0.0
        %1106 = vmatprep.subr.mxu0 0.0
        %1107 = vmatpush1.msra.mxu0 0.0
        %1108 = vmatprep.subr.mxu0 0.0
        %1109 = vmatpush1.msra.mxu0 0.0
        %1110 = vmatprep.subr.mxu0 0.0
        %1111 = vmatpush1.msra.mxu0 0.0
        %1112 = vmatprep.subr.mxu0 0.0
        %1113 = vmatpush1.msra.mxu0 0.0
        %1114 = vmatprep.subr.mxu0 0.0
        %1115 = vmatpush1.msra.mxu0 0.0
        %1116 = vmatprep.mubr.f32.mxu0 0.0
        %1117 = vmatmul.mubr.f32.gmra.mrb[0].mxu0 %v909
        %v1118 = vpop.f32.mrb[0].mxu0
        %v1119 = vadd.f32 0.0, %v1118
        %v1120 = vpop.f32.mrb[0].mxu0
        %v1121 = vadd.f32 0.0, %v1120
        %1122 = vmatprep.mubr.f32.mxu0 0.0
        %1123 = vmatmul.mubr.f32.gmra.mrb[0].mxu0 %v910
        %v1124 = vpop.f32.mrb[0].mxu0
        %v1125 = vadd.f32 0.0, %v1124
        %v1126 = vpop.f32.mrb[0].mxu0
        %v1127 = vadd.f32 0.0, %v1126
        %1128 = vdwg.mxu0
        %v1129 = vld [vmem:[%s8] sm:$0xf]
        %v1131 = vlaneseq
        %v1132 = vshrl.u32 %v1131, 7
        %v1133 = vsub.s32 0, %v1132
        %v1134 = vrot.slane %v1129, %v1133
        %v1135 = vlaneseq
        %v1136 = vshrl.u32 %v1135, 7
        %v1137 = vsub.s32 1, %v1136
        %v1138 = vrot.slane %v1129, %v1137
        %v1139 = vlaneseq
        %v1140 = vshrl.u32 %v1139, 7
        %v1141 = vsub.s32 2, %v1140
        %v1142 = vrot.slane %v1129, %v1141
        %v1143 = vlaneseq
        %v1144 = vshrl.u32 %v1143, 7
        %v1145 = vsub.s32 3, %v1144
        %v1146 = vrot.slane %v1129, %v1145
        %v1151 = vmul.f32 %v1042, %v1134
        %v1152 = vmul.f32 %v1044, %v1138
        %v1153 = vmul.f32 %v1119, %v1142
        %v1154 = vmul.f32 %v1121, %v1146
        %v1155 = vmul.f32 %v1048, %v1134
        %v1156 = vmul.f32 %v1050, %v1138
        %v1157 = vmul.f32 %v1125, %v1142
        %v1158 = vmul.f32 %v1127, %v1146
        %v1159 = vld [vmem:[%s9] sm:$0xf]
        %v1161 = vlaneseq
        %v1162 = vshrl.u32 %v1161, 7
        %v1163 = vsub.s32 0, %v1162
        %v1164 = vrot.slane %v1159, %v1163
        %v1165 = vlaneseq
        %v1166 = vshrl.u32 %v1165, 7
        %v1167 = vsub.s32 1, %v1166
        %v1168 = vrot.slane %v1159, %v1167
        %v1169 = vlaneseq
        %v1170 = vshrl.u32 %v1169, 7
        %v1171 = vsub.s32 2, %v1170
        %v1172 = vrot.slane %v1159, %v1171
        %v1173 = vlaneseq
        %v1174 = vshrl.u32 %v1173, 7
        %v1175 = vsub.s32 3, %v1174
        %v1176 = vrot.slane %v1159, %v1175
        %v1181 = vadd.f32 %v1151, %v1164
        %v1182 = vadd.f32 %v1152, %v1168
        %v1183 = vadd.f32 %v1153, %v1172
        %v1184 = vadd.f32 %v1154, %v1176
        %v1185 = vadd.f32 %v1155, %v1164
        %v1186 = vadd.f32 %v1156, %v1168
        %v1187 = vadd.f32 %v1157, %v1172
        %v1188 = vadd.f32 %v1158, %v1176
        %v1189 = vadd.f32 %v1181, %v422
        %v1190 = vadd.f32 %v1182, %v423
        %v1191 = vadd.f32 %v1183, %v424
        %v1192 = vadd.f32 %v1184, %v425
        %v1193 = vadd.f32 %v1185, %v426
        %v1194 = vadd.f32 %v1186, %v427
        %v1195 = vadd.f32 %v1187, %v428
        %v1196 = vadd.f32 %v1188, %v429
        %v1197 = vmax.f32 %v1189, 0.0
        %v1198 = vmax.f32 %v1190, 0.0
        %v1199 = vmax.f32 %v1191, 0.0
        %v1200 = vmax.f32 %v1192, 0.0
        %v1201 = vmax.f32 %v1193, 0.0
        %v1202 = vmax.f32 %v1194, 0.0
        %v1203 = vmax.f32 %v1195, 0.0
        %v1204 = vmax.f32 %v1196, 0.0
        %1205 = vst [vmem:[%s421] sm:$0xff] %v1197
        %1206 = vst [vmem:[%s421 + $0x8] sm:$0xff] %v1198
        %1207 = vst [vmem:[%s421 + $0x10] sm:$0xff] %v1199
        %1208 = vst [vmem:[%s421 + $0x18] sm:$0xff] %v1200
        %1209 = vst [vmem:[%s421 + $0x20] sm:$0xff] %v1201
        %1210 = vst [vmem:[%s421 + $0x28] sm:$0xff] %v1202
        %1211 = vst [vmem:[%s421 + $0x30] sm:$0xff] %v1203
        %1212 = vst [vmem:[%s421 + $0x38] sm:$0xff] %v1204
        %s1213 = sand.u32 %s252, 1
        %s1214 = scalar_lea.sflag [#allocation4], %s1213
        %s1215 = sand.u32 %s252, 1
        %s1216 = smul.addr %s1215, 64
        %s1217 = scalar_lea.vmem [#allocation10], %s1216
        // Predicated region
        $region77: #{tpu_custom_call.1} parent=59 // pred_check
          %p1218 = pneg %p262
        $region78: #{tpu_custom_call.1} parent=59 // pred_check_branch
          %1220 = sbr.rel (%p1218) target = $region80
        $region79: #{tpu_custom_call.1} parent=59 // pred_region
          %s1222 = ssub.s32 1024, 1024
          %1223 = vsyncadd %s1214, %s1222
          %s1224 = smul.addr %s29, 8
          %s1225 = smul.addr %s1224, 128
          %s1226 = scalar_lea.hbm %s10, %s1225
          %s1227 = sshll.u32 %s1217, 4
          %s1228 = int_to_ptr.vmem [resolvable:$true] %s1227
          %1233 = dma.vmem_to_hbm [thread:$0]  %s1228, 1024, %s1226, %s1214, 512, 512, 32
        $region80: #{tpu_custom_call.1} parent=59 // pred_fallthru
          _
      $region60: #{tpu_custom_call.1} parent=5 // pred_fallthru
        _
      %p1234 = scmp.le.s32.totalorder 2, %s24
      // Predicated region
      $region81: #{tpu_custom_call.1} parent=5 // pred_check
        %p1235 = pneg %p1234
      $region82: #{tpu_custom_call.1} parent=5 // pred_check_branch
        %1237 = sbr.rel (%p1235) target = $region84
      $region83: #{tpu_custom_call.1} parent=5 // pred_region
        %s1238 = ssub.s32 %s24, 2
        // Predicated region
        $region85: #{tpu_custom_call.1} parent=83 // pred_check
          %p1239 = pneg %p268
        $region86: #{tpu_custom_call.1} parent=83 // pred_check_branch
          %1241 = sbr.rel (%p1239) target = $region88
        $region87: #{tpu_custom_call.1} parent=83 // pred_region
          %s1242 = sand.u32 %s253, 1
          %s1243 = scalar_lea.sflag [#allocation4], %s1242
          %s1244 = sand.u32 %s253, 1
          %s1245 = smul.addr %s1244, 64
          %s1246 = scalar_lea.vmem [#allocation10], %s1245
          %1247 = dma.done %s1243, 1024
        $region88: #{tpu_custom_call.1} parent=83 // pred_fallthru
          _
      $region84: #{tpu_custom_call.1} parent=5 // pred_fallthru
        _
    $region6: #{tpu_custom_call.1} parent=1 // loop_footer
      %s28 = sadd.s32 1, %s24
    $region7: #{tpu_custom_call.1} parent=1 // loop_footer_branch
      %23 = sbr.rel target = $region3
    $region8: #{tpu_custom_call.1} parent=1 // loop_exit
      _
    %1248 = vsyncpa [#allocation3], 1
    %s1249 = scalar_lea.sflag [#allocation3], 1
    %1250 = vsyncpa %s1249, 1
    %1251 = vsyncpa [#allocation6], 1
    %1252 = vsyncpa [#allocation9], 1
    %1253 = vsyncpa [#allocation4], 1
    %s1254 = scalar_lea.sflag [#allocation4], 1
    %1255 = vsyncpa %s1254, 1

</llo_original>
